<compile_context>
chip_gen: v5e
topology: v5e:2x2
jax: 0.10.0
libtpu: 0.0.40
codegen_flags: <defaults>
</compile_context>

<pallas_src>
import math

import jax
import jax.numpy as jnp
from jax import lax
from jax.experimental import pallas as pl
from jax.experimental.pallas import tpu as pltpu


def _vmem_limit_bytes():
    # Derive the scoped-VMEM budget from the device (v5e/v6e: 128 MiB, v7x: 64 MiB).
    try:
        return int(0.75 * pltpu.get_tpu_info().vmem_capacity_bytes)
    except Exception:
        return 48 * 1024 * 1024


VMEM_LIMIT = _vmem_limit_bytes()


# ----------------------------------------------------------------------------
# In-kernel helpers
# ----------------------------------------------------------------------------
def _layernorm(v, w, b, eps=1e-5):
    v = v.astype(jnp.float32)
    mu = jnp.mean(v, axis=-1, keepdims=True)
    var = jnp.mean((v - mu) ** 2, axis=-1, keepdims=True)
    return (v - mu) * lax.rsqrt(var + eps) * w + b


def _apply_rope(x, cos, sin_signed):
    """Rotate-half RoPE on a (rows, head_dim) tile.

    Because the q/k weight columns are de-interleaved at init time
    ([x0,x2,...,x1,x3,...]), this single roll + 2 mul/adds is numerically identical
    to the reference interleaved (complex) RoPE, while q.k stays unchanged.
        cos        = [c0..c_{hd/2-1}, c0..c_{hd/2-1}]
        sin_signed = [-s0..-s_{hd/2-1}, +s0..+s_{hd/2-1}]
    """
    hd = x.shape[-1]
    return x * cos + pltpu.roll(x, shift=hd // 2, axis=1) * sin_signed


# ----------------------------------------------------------------------------
# Kernel 1: LayerNorm1 + grouped-head QKV projection + RoPE (+ 1/sqrt(hd) into Q)
#   grid = (B, L_tiles, G); LN(x) is computed once per row tile (g == 0) and
#   cached in VMEM scratch, then reused for every head group (g is "arbitrary").
# ----------------------------------------------------------------------------
def ln_qkv_rope_kernel(x_ref, cos_ref, sin_ref, ln1w_ref, ln1b_ref, wqkv_ref,
                       q_ref, k_ref, v_ref, xn_sc):
    g = pl.program_id(2)

    @pl.when(g == 0)
    def _():
        xn_sc[...] = _layernorm(x_ref[0], ln1w_ref[0], ln1b_ref[0]).astype(xn_sc.dtype)

    w = wqkv_ref[0]                                         # (D, Hg*3*hd) bf16
    qkv = jnp.dot(xn_sc[...], w, preferred_element_type=jnp.float32)   # (tl, Hg*3*hd) f32
    cos = cos_ref[...]
    sin = sin_ref[...]
    hg, hd = q_ref.shape[1], q_ref.shape[3]
    scale = 1.0 / math.sqrt(hd)
    for hh in range(hg):                                    # static unroll over grouped heads
        base = hh * 3 * hd
        qh = qkv[:, base:base + hd]
        kh = qkv[:, base + hd:base + 2 * hd]
        vh = qkv[:, base + 2 * hd:base + 3 * hd]
        q_ref[0, hh] = (_apply_rope(qh, cos, sin) * scale).astype(q_ref.dtype)
        k_ref[0, hh] = _apply_rope(kh, cos, sin).astype(k_ref.dtype)
        v_ref[0, hh] = vh.astype(v_ref.dtype)


# ----------------------------------------------------------------------------
# Kernel 2: causal flash attention with online softmax
#   grid = (B, H, q_tiles, kv_tiles); K/V index maps are causally clamped so the
#   skipped upper-triangular tiles are never DMA'd (resident block is reused);
#   the causal mask is only built on diagonal-straddling tiles.  Output heads are
#   written straight into a (B, L, D) slab (concat-of-heads layout).
# ----------------------------------------------------------------------------
def flash_attn_kernel(q_ref, k_ref, v_ref, o_ref, m_sc, l_sc, acc_sc):
    qi = pl.program_id(2)
    ki = pl.program_id(3)
    tq = q_ref.shape[2]
    tk = k_ref.shape[2]

    @pl.when(ki == 0)
    def _():
        m_sc[...] = jnp.full(m_sc.shape, -1e30, dtype=m_sc.dtype)
        l_sc[...] = jnp.zeros(l_sc.shape, l_sc.dtype)
        acc_sc[...] = jnp.zeros(acc_sc.shape, acc_sc.dtype)

    def _step(masked):
        q = q_ref[0, 0]                                  # (tq, hd) bf16, pre-scaled
        k = k_ref[0, 0]                                  # (tk, hd) bf16
        v = v_ref[0, 0]                                  # (tk, hd) bf16
        s = lax.dot_general(q, k, (((1,), (1,)), ((), ())),
                            preferred_element_type=jnp.float32)        # (tq, tk) f32
        if masked:
            rows = qi * tq + lax.broadcasted_iota(jnp.int32, (tq, tk), 0)
            cols = ki * tk + lax.broadcasted_iota(jnp.int32, (tq, tk), 1)
            s = jnp.where(cols <= rows, s, -1e30)
        m_prev = m_sc[...]
        m_new = jnp.maximum(m_prev, jnp.max(s, axis=-1, keepdims=True))
        alpha = jnp.exp(m_prev - m_new)
        p = jnp.exp(s - m_new)
        l_sc[...] = alpha * l_sc[...] + jnp.sum(p, axis=-1, keepdims=True)
        acc_sc[...] = alpha * acc_sc[...] + jnp.dot(
            p.astype(v.dtype), v, preferred_element_type=jnp.float32)
        m_sc[...] = m_new

    below_diag = (ki * tk + tk - 1) <= (qi * tq)             # tile fully visible -> no mask
    on_diag = jnp.logical_and(ki * tk <= qi * tq + (tq - 1),
                              jnp.logical_not(below_diag))

    @pl.when(below_diag)
    def _():
        _step(False)

    @pl.when(on_diag)
    def _():
        _step(True)

    @pl.when(ki == pl.num_programs(3) - 1)
    def _():
        out = acc_sc[...] * pl.reciprocal(l_sc[...], approx=True)
        o_ref[...] = out.reshape(o_ref.shape).astype(o_ref.dtype)


# ----------------------------------------------------------------------------
# Kernel 3: attention out-projection + residual + LayerNorm2 + SiLU FFN
#   grid = (B, L_tiles, n_proj + n_ffn): one reduction axis covers both the
#   out-projection contraction (wproj streamed in (tdk, D) chunks, never fully
#   resident -> v7x-safe) and the FFN hidden dimension (f32 VMEM accumulator).
# ----------------------------------------------------------------------------
def proj_ffn_kernel(x_ref, attn_ref, wproj_ref, bproj_ref, ln2w_ref, ln2b_ref,
                    wfc_ref, bfc_ref, wfc2_ref, bfc2_ref, o_ref,
                    h1_sc, hn_sc, acc_sc):
    r = pl.program_id(2)
    tdk = wproj_ref.shape[0]
    D = x_ref.shape[2]
    n_proj = D // tdk                                       # static

    @pl.when(r == 0)
    def _():
        h1_sc[...] = x_ref[0].astype(jnp.float32) + bproj_ref[0]

    @pl.when(r < n_proj)
    def _():
        # attn_ref block is the (tl, tdk) column chunk matching this wproj row chunk.
        h1_sc[...] += jnp.dot(attn_ref[0], wproj_ref[...],
                              preferred_element_type=jnp.float32)

    @pl.when(r == n_proj - 1)
    def _():
        hn_sc[...] = _layernorm(h1_sc[...], ln2w_ref[0], ln2b_ref[0]).astype(hn_sc.dtype)
        acc_sc[...] = jnp.zeros(acc_sc.shape, acc_sc.dtype)

    @pl.when(r >= n_proj)
    def _():
        ff = jnp.dot(hn_sc[...], wfc_ref[...], preferred_element_type=jnp.float32) + bfc_ref[0]
        ff = ff * pl.reciprocal(1.0 + jnp.exp(-ff), approx=True)       # SiLU (recip on EUP)
        acc_sc[...] += jnp.dot(ff.astype(jnp.bfloat16), wfc2_ref[...],
                               preferred_element_type=jnp.float32)

    @pl.when(r == pl.num_programs(2) - 1)
    def _():
        o_ref[0] = h1_sc[...] + acc_sc[...] + bfc2_ref[0]              # residual 2


# ----------------------------------------------------------------------------
# Kernel 4: final LayerNorm (computed once per row tile, cached) + vocab head
#   grid = (B, L_tiles, V_tiles); vocab padded to a lane-dense width at init.
# ----------------------------------------------------------------------------
def lnf_head_kernel(x_ref, lnw_ref, lnb_ref, w_ref, b_ref, o_ref, xn_sc):
    @pl.when(pl.program_id(2) == 0)
    def _():
        xn_sc[...] = _layernorm(x_ref[0], lnw_ref[0], lnb_ref[0]).astype(xn_sc.dtype)

    o_ref[0] = jnp.dot(xn_sc[...], w_ref[...],
                       preferred_element_type=jnp.float32) + b_ref[0]


# ----------------------------------------------------------------------------
# Wrappers
# ----------------------------------------------------------------------------
def _full(a):
    zeros = (0,) * a.ndim
    return pl.BlockSpec(a.shape, lambda *_: zeros)


def _seq_tile(n, cap=256):
    t = n if n <= cap else cap
    assert n % t == 0, f"length {n} must be a multiple of the tile {t}"
    return t


def _round_up(n, m):
    return ((n + m - 1) // m) * m


def _pick_head_group(H, hd, max_cols=1536):
    """Largest divisor of H whose grouped QKV width 3*hd*Hg fits the column cap."""
    hg = 1
    for g in range(1, H + 1):
        if H % g == 0 and 3 * hd * g <= max_cols:
            hg = g
    return hg


def ln_qkv_rope(x, cos_t, sin_t, ln1w, ln1b, wqkv_g):
    B, L, D = x.shape
    G, _, cols = wqkv_g.shape
    hd = cos_t.shape[1]
    Hg = cols // (3 * hd)
    H = G * Hg
    tl = _seq_tile(L)
    out_sds = jax.ShapeDtypeStruct((B, H, L, hd), jnp.bfloat16)
    out_spec = pl.BlockSpec((1, Hg, tl, hd), lambda b, l, g: (b, g, l, 0))
    return pl.pallas_call(
        ln_qkv_rope_kernel,
        grid=(B, L // tl, G),
        in_specs=[
            pl.BlockSpec((1, tl, D), lambda b, l, g: (b, l, 0)),
            pl.BlockSpec((tl, hd), lambda b, l, g: (l, 0)),
            pl.BlockSpec((tl, hd), lambda b, l, g: (l, 0)),
            _full(ln1w), _full(ln1b),
            pl.BlockSpec((1, D, cols), lambda b, l, g: (g, 0, 0)),
        ],
        out_shape=(out_sds, out_sds, out_sds),
        out_specs=(out_spec, out_spec, out_spec),
        scratch_shapes=[pltpu.VMEM((tl, D), jnp.bfloat16)],
        compiler_params=pltpu.CompilerParams(
            dimension_semantics=("parallel", "parallel", "arbitrary"),
            vmem_limit_bytes=VMEM_LIMIT),
    )(x, cos_t, sin_t, ln1w, ln1b, wqkv_g)


def flash_attention(q, k, v):
    B, H, L, hd = q.shape
    D = H * hd
    tq = _seq_tile(L, 512)         # bigger q tile: K/V re-streamed fewer times
    tk = _seq_tile(L, 256)
    nk = L // tk

    def kv_idx(b, h, qi, ki):
        # Clamp to the causal range: skipped upper-triangle steps map to the last
        # visited block, so no DMA is issued for them (~2x less K/V HBM traffic).
        last = ((qi + 1) * tq - 1) // tk
        return (b, h, jnp.minimum(ki, last), 0)

    q_spec = pl.BlockSpec((1, 1, tq, hd), lambda b, h, qi, ki: (b, h, qi, 0))
    kv_spec = pl.BlockSpec((1, 1, tk, hd), kv_idx)

    concat = (hd % 128 == 0)       # lane-aligned head slab -> write straight into (B, L, D)
    if concat:
        out_shape = jax.ShapeDtypeStruct((B, L, D), jnp.bfloat16)
        out_spec = pl.BlockSpec((1, tq, hd), lambda b, h, qi, ki: (b, qi, h))
    else:
        out_shape = jax.ShapeDtypeStruct((B, H, L, hd), jnp.bfloat16)
        out_spec = pl.BlockSpec((1, 1, tq, hd), lambda b, h, qi, ki: (b, h, qi, 0))

    out = pl.pallas_call(
        flash_attn_kernel,
        grid=(B, H, L // tq, nk),
        in_specs=[q_spec, kv_spec, kv_spec],
        out_shape=out_shape,
        out_specs=out_spec,
        scratch_shapes=[pltpu.VMEM((tq, 1), jnp.float32),
                        pltpu.VMEM((tq, 1), jnp.float32),
                        pltpu.VMEM((tq, hd), jnp.float32)],
        compiler_params=pltpu.CompilerParams(
            dimension_semantics=("parallel", "parallel", "parallel", "arbitrary"),
            vmem_limit_bytes=VMEM_LIMIT),
    )(q, k, v)
    if not concat:
        out = out.transpose(0, 2, 1, 3).reshape(B, L, D)
    return out


def proj_residual_ffn(x, attn, layer):
    B, L, D = x.shape
    F = layer["wfc"].shape[1]
    tl = _seq_tile(L)
    tdk = 256 if D % 256 == 0 else D          # out-proj contraction chunk (v7x VMEM-safe)
    tf = 512 if F % 512 == 0 else F
    n_proj = D // tdk
    n_ffn = F // tf
    return pl.pallas_call(
        proj_ffn_kernel,
        grid=(B, L // tl, n_proj + n_ffn),
        in_specs=[
            pl.BlockSpec((1, tl, D), lambda b, l, r: (b, l, 0)),
            pl.BlockSpec((1, tl, tdk),
                         lambda b, l, r: (b, l, jnp.minimum(r, n_proj - 1))),
            pl.BlockSpec((tdk, D), lambda b, l, r: (jnp.minimum(r, n_proj - 1), 0)),
            _full(layer["bproj"]),
            _full(layer["ln2_w"]), _full(layer["ln2_b"]),
            pl.BlockSpec((D, tf), lambda b, l, r: (0, jnp.maximum(r - n_proj, 0))),
            pl.BlockSpec((1, tf), lambda b, l, r: (0, jnp.maximum(r - n_proj, 0))),
            pl.BlockSpec((tf, D), lambda b, l, r: (jnp.maximum(r - n_proj, 0), 0)),
            _full(layer["bfc2"]),
        ],
        out_shape=jax.ShapeDtypeStruct((B, L, D), jnp.float32),
        out_specs=pl.BlockSpec((1, tl, D), lambda b, l, r: (b, l, 0)),
        scratch_shapes=[pltpu.VMEM((tl, D), jnp.float32),
                        pltpu.VMEM((tl, D), jnp.bfloat16),
                        pltpu.VMEM((tl, D), jnp.float32)],
        compiler_params=pltpu.CompilerParams(
            dimension_semantics=("parallel", "parallel", "arbitrary"),
            vmem_limit_bytes=VMEM_LIMIT),
    )(x, attn, layer["wproj"], layer["bproj"], layer["ln2_w"], layer["ln2_b"],
      layer["wfc"], layer["bfc"], layer["wfc2"], layer["bfc2"])


def gen_head(x, lnw, lnb, w_p, b_p):
    B, L, D = x.shape
    Vp = w_p.shape[1]                      # already padded (init-time) to a lane-dense width
    tl = _seq_tile(L)
    tv = Vp if Vp <= 512 else 512
    assert Vp % tv == 0
    return pl.pallas_call(
        lnf_head_kernel,
        grid=(B, L // tl, Vp // tv),
        in_specs=[
            pl.BlockSpec((1, tl, D), lambda b, l, vv: (b, l, 0)),
            _full(lnw), _full(lnb),
            pl.BlockSpec((D, tv), lambda b, l, vv: (0, vv)),
            pl.BlockSpec((1, tv), lambda b, l, vv: (0, vv)),
        ],
        out_shape=jax.ShapeDtypeStruct((B, L, Vp), jnp.float32),
        out_specs=pl.BlockSpec((1, tl, tv), lambda b, l, vv: (b, l, vv)),
        scratch_shapes=[pltpu.VMEM((tl, D), jnp.bfloat16)],
        compiler_params=pltpu.CompilerParams(
            dimension_semantics=("parallel", "parallel", "arbitrary"),
            vmem_limit_bytes=VMEM_LIMIT),
    )(x, lnw, lnb, w_p, b_p)


# ----------------------------------------------------------------------------
# Parameter / rotary-table construction (plain JAX glue, init-time only)
# ----------------------------------------------------------------------------
def precompute_rope_tables(head_dim, end, theta=10000.0):
    """Rotate-half RoPE tables: cos = [c..c | c..c], sin = [-s..-s | +s..+s]."""
    freqs = 1.0 / theta ** (
        jnp.arange(0, head_dim, 2)[: head_dim // 2].astype(jnp.float32) / head_dim)
    t = jnp.arange(end, dtype=jnp.float32)
    ang = jnp.outer(t, freqs)                                  # (end, hd/2)
    cos = jnp.cos(ang)
    sin = jnp.sin(ang)
    cos_rh = jnp.concatenate([cos, cos], axis=-1)              # (end, hd)
    sin_rh = jnp.concatenate([-sin, sin], axis=-1)
    return cos_rh, sin_rh


def init_model(key, vocab_in, vocab_out, num_layers, model_dim, ff_dim, num_heads):
    std = 0.02
    proj_std = 0.02 / math.sqrt(2 * num_layers)
    hd = model_dim // num_heads
    H = num_heads
    Hg = _pick_head_group(H, hd)
    G = H // Hg
    keys = jax.random.split(key, 2 + num_layers)
    params = {
        "tok_embed": std * jax.random.normal(keys[0], (vocab_in, model_dim), jnp.float32),
        "num_heads": H, "head_dim": hd,
    }
    # De-interleave permutation for q/k columns (makes in-kernel rotate-half RoPE exact).
    perm = jnp.concatenate([jnp.arange(0, hd, 2), jnp.arange(1, hd, 2)])
    layers = []
    for l in range(num_layers):
        k = jax.random.split(keys[2 + l], 4)
        wqkv = std * jax.random.normal(k[0], (model_dim, 3 * model_dim), jnp.float32)
        blocks = []
        for h in range(H):
            wq = wqkv[:, h * hd:(h + 1) * hd][:, perm]
            wk = wqkv[:, model_dim + h * hd:model_dim + (h + 1) * hd][:, perm]
            wv = wqkv[:, 2 * model_dim + h * hd:2 * model_dim + (h + 1) * hd]
            blocks.append(jnp.concatenate([wq, wk, wv], axis=1))        # (D, 3*hd)
        per_head = jnp.stack(blocks, 0)                                 # (H, D, 3*hd)
        wqkv_g = per_head.reshape(G, Hg, model_dim, 3 * hd).transpose(0, 2, 1, 3) \
                         .reshape(G, model_dim, Hg * 3 * hd)
        layers.append({
            "ln1_w": jnp.ones((1, model_dim), jnp.float32),
            "ln1_b": jnp.zeros((1, model_dim), jnp.float32),
            "wqkv": wqkv_g.astype(jnp.bfloat16),
            "wqkv_ref": wqkv.astype(jnp.bfloat16),          # original layout (reference only)
            "wproj": (proj_std * jax.random.normal(k[1], (model_dim, model_dim),
                                                   jnp.float32)).astype(jnp.bfloat16),
            "bproj": jnp.zeros((1, model_dim), jnp.float32),
            "ln2_w": jnp.ones((1, model_dim), jnp.float32),
            "ln2_b": jnp.zeros((1, model_dim), jnp.float32),
            "wfc": (std * jax.random.normal(k[2], (model_dim, ff_dim), jnp.float32)
                    ).astype(jnp.bfloat16),
            "bfc": jnp.zeros((1, ff_dim), jnp.float32),
            "wfc2": (proj_std * jax.random.normal(k[3], (ff_dim, model_dim), jnp.float32)
                     ).astype(jnp.bfloat16),
            "bfc2": jnp.zeros((1, model_dim), jnp.float32),
        })
    params["layers"] = layers
    params["lnf_w"] = jnp.ones((1, model_dim), jnp.float32)
    params["lnf_b"] = jnp.zeros((1, model_dim), jnp.float32)
    # Pad the vocab head once at init time to a lane-dense width (no per-forward padded copy).
    Vp = _round_up(vocab_out, 512) if vocab_out > 512 else _round_up(vocab_out, 128)
    hw = std * jax.random.normal(keys[1], (model_dim, vocab_out), jnp.float32)
    params["head_w"] = jnp.zeros((model_dim, Vp), jnp.bfloat16).at[:, :vocab_out].set(
        hw.astype(jnp.bfloat16))
    params["head_b"] = jnp.zeros((1, Vp), jnp.float32)
    params["vocab_out"] = vocab_out
    return params


def transformer_forward(tokens, params, cos_tab, sin_tab):
    B, L = tokens.shape
    # Embedding lookup (gather) kept as JAX glue.
    h = jnp.take(params["tok_embed"], tokens, axis=0)           # (B, L, D) f32
    cos_t = cos_tab[:L]                                         # (L, head_dim)
    sin_t = sin_tab[:L]
    for layer in params["layers"]:
        q, k, v = ln_qkv_rope(h, cos_t, sin_t,
                              layer["ln1_w"], layer["ln1_b"], layer["wqkv"])
        attn = flash_attention(q, k, v)                         # (B, L, D) bf16
        h = proj_residual_ffn(h, attn, layer)                   # (B, L, D) f32
    logits = gen_head(h, params["lnf_w"], params["lnf_b"],
                      params["head_w"], params["head_b"])
    return logits[:, :, :params["vocab_out"]]


# ----------------------------------------------------------------------------
# Pure-JAX reference (mirrors the PyTorch forward, with matching bf16 rounding points)
# ----------------------------------------------------------------------------
def _ref_forward(tokens, params):
    H, hd = params["num_heads"], params["head_dim"]
    emb = params["tok_embed"]
    B, L = tokens.shape
    D = emb.shape[1]

    def rnd(v):
        return v.astype(jnp.bfloat16).astype(jnp.float32)

    def ln(v, w, b, eps=1e-5):
        mu = v.mean(-1, keepdims=True)
        var = ((v - mu) ** 2).mean(-1, keepdims=True)
        return (v - mu) * lax.rsqrt(var + eps) * w + b

    freqs = 1.0 / 10000.0 ** (jnp.arange(0, hd, 2)[: hd // 2].astype(jnp.float32) / hd)
    ang = jnp.outer(jnp.arange(L, dtype=jnp.float32), freqs)
    cos, sin = jnp.cos(ang), jnp.sin(ang)

    def rope(x):                                   # interleaved, as in the PyTorch reference
        xr = x.reshape(*x.shape[:-1], hd // 2, 2)
        xe, xo = xr[..., 0], xr[..., 1]
        c = cos[None, :, None, :]
        s = sin[None, :, None, :]
        return jnp.stack([xe * c - xo * s, xo * c + xe * s], axis=-1).reshape(x.shape)

    h = jnp.take(emb, tokens, axis=0)
    causal = jnp.tril(jnp.ones((L, L), dtype=bool))
    for layer in params["layers"]:
        xn = rnd(ln(h, layer["ln1_w"][0], layer["ln1_b"][0]))
        qkv = xn @ layer["wqkv_ref"].astype(jnp.float32)
        q, k, v = jnp.split(qkv, 3, axis=-1)
        q = rnd(rope(q.reshape(B, L, H, hd)))
        k = rnd(rope(k.reshape(B, L, H, hd)))
        v = rnd(v.reshape(B, L, H, hd))
        s = jnp.einsum("blhd,bmhd->bhlm", q, k) / math.sqrt(hd)
        s = jnp.where(causal[None, None], s, -jnp.inf)
        p = rnd(jax.nn.softmax(s, axis=-1))
        attn = rnd(jnp.einsum("bhlm,bmhd->blhd", p, v).reshape(B, L, D))
        h = h + attn @ layer["wproj"].astype(jnp.float32) + layer["bproj"][0]
        hn = rnd(ln(h, layer["ln2_w"][0], layer["ln2_b"][0]))
        ff = hn @ layer["wfc"].astype(jnp.float32) + layer["bfc"][0]
        ff = rnd(ff * jax.nn.sigmoid(ff))
        h = h + ff @ layer["wfc2"].astype(jnp.float32) + layer["bfc2"][0]
    xn = rnd(ln(h, params["lnf_w"][0], params["lnf_b"][0]))
    logits = xn @ params["head_w"].astype(jnp.float32) + params["head_b"][0]
    return logits[:, :, :params["vocab_out"]]


# ----------------------------------------------------------------------------
if __name__ == "__main__":
    B, L = 2, 8
    vocab_in, vocab_out = 16, 16
    num_layers = 2
    max_seq_len = 8
    model_dim, num_heads, ff_dim = 256, 2, 512        # head_dim = 128 (lane-aligned)
    head_dim = model_dim // num_heads

    key = jax.random.PRNGKey(0)
    k_params, k_tok = jax.random.split(key)
    params = init_model(k_params, vocab_in, vocab_out, num_layers,
                        model_dim, ff_dim, num_heads)
    cos_tab, sin_tab = precompute_rope_tables(head_dim, max_seq_len + 2)

    tokens = jax.random.randint(k_tok, (B, L), 0, vocab_in, dtype=jnp.int32)

    logits = transformer_forward(tokens, params, cos_tab, sin_tab)
    jax.block_until_ready(logits)
    assert logits.shape == (B, L, vocab_out) and logits.dtype == jnp.float32
    assert bool(jnp.all(jnp.isfinite(logits)))

    ref = _ref_forward(tokens, params)
    err = float(jnp.max(jnp.abs(logits - ref)))
    assert err < 5e-2, f"logits mismatch vs pure-JAX reference: max abs err {err}"

    print("KERNEL_OK")
</pallas_src>

<mosaic_0001>
module attributes {stable_mosaic.version = 11 : i64} {
  func.func @ln_qkv_rope_kernel(%arg0: i32, %arg1: i32, %arg2: i32, %arg3: memref<1x8x256xf32, #tpu.memory_space<vmem>>, %arg4: memref<8x128xf32, #tpu.memory_space<vmem>>, %arg5: memref<8x128xf32, #tpu.memory_space<vmem>>, %arg6: memref<1x256xf32, #tpu.memory_space<vmem>>, %arg7: memref<1x256xf32, #tpu.memory_space<vmem>>, %arg8: memref<1x256x768xbf16, #tpu.memory_space<vmem>>, %arg9: memref<1x2x8x128xbf16, #tpu.memory_space<vmem>>, %arg10: memref<1x2x8x128xbf16, #tpu.memory_space<vmem>>, %arg11: memref<1x2x8x128xbf16, #tpu.memory_space<vmem>>, %arg12: memref<8x256xbf16, #tpu.memory_space<vmem>>) attributes {dimension_semantics = [#tpu.dimension_semantics<parallel>, #tpu.dimension_semantics<parallel>, #tpu.dimension_semantics<arbitrary>], iteration_bounds = array<i64: 2, 1, 1>, scalar_prefetch = 0 : i64, scratch_operands = 1 : i64, tpu.core_type = #tpu.core_type<tc>, window_params = [{transform_indices = @transform_0, window_bounds = array<i64: 1, 8, 256>}, {transform_indices = @transform_1, window_bounds = array<i64: 8, 128>}, {transform_indices = @transform_2, window_bounds = array<i64: 8, 128>}, {pipeline_mode = #tpu.pipeline_mode<synchronous>, transform_indices = @transform_3, window_bounds = array<i64: 1, 256>}, {pipeline_mode = #tpu.pipeline_mode<synchronous>, transform_indices = @transform_4, window_bounds = array<i64: 1, 256>}, {transform_indices = @transform_5, window_bounds = array<i64: 1, 256, 768>}, {transform_indices = @transform_6, window_bounds = array<i64: 1, 2, 8, 128>}, {transform_indices = @transform_7, window_bounds = array<i64: 1, 2, 8, 128>}, {transform_indices = @transform_8, window_bounds = array<i64: 1, 2, 8, 128>}]} {
    %c0_i32 = arith.constant 0 : i32
    %0 = arith.cmpi eq, %arg2, %c0_i32 : i32
    %1 = arith.extui %0 : i1 to i32
    %c0_i32_0 = arith.constant 0 : i32
    %2 = arith.cmpi ne, %1, %c0_i32_0 : i32
    scf.if %2 {
      %c0_37 = arith.constant 0 : index
      %c0_38 = arith.constant 0 : index
      %c0_39 = arith.constant 0 : index
      %59 = vector.load %arg3[%c0_37, %c0_38, %c0_39] : memref<1x8x256xf32, #tpu.memory_space<vmem>>, vector<1x8x256xf32>
      %60 = vector.shape_cast %59 : vector<1x8x256xf32> to vector<8x256xf32>
      %c0_40 = arith.constant 0 : index
      %c0_41 = arith.constant 0 : index
      %61 = vector.load %arg6[%c0_40, %c0_41] : memref<1x256xf32, #tpu.memory_space<vmem>>, vector<1x256xf32>
      %62 = vector.shape_cast %61 : vector<1x256xf32> to vector<256xf32>
      %c0_42 = arith.constant 0 : index
      %c0_43 = arith.constant 0 : index
      %63 = vector.load %arg7[%c0_42, %c0_43] : memref<1x256xf32, #tpu.memory_space<vmem>>, vector<1x256xf32>
      %64 = vector.shape_cast %63 : vector<1x256xf32> to vector<256xf32>
      %cst_44 = arith.constant dense<0.000000e+00> : vector<8xf32>
      %65 = vector.multi_reduction <add>, %60, %cst_44 [1] : vector<8x256xf32> to vector<8xf32>
      %66 = vector.shape_cast %65 : vector<8xf32> to vector<8x1xf32>
      %cst_45 = arith.constant 2.560000e+02 : f32
      %67 = vector.broadcast %cst_45 : f32 to vector<8x1xf32>
      %68 = arith.divf %66, %67 : vector<8x1xf32>
      %69 = vector.broadcast %68 : vector<8x1xf32> to vector<8x256xf32>
      %70 = arith.subf %60, %69 : vector<8x256xf32>
      %71 = arith.mulf %70, %70 : vector<8x256xf32>
      %cst_46 = arith.constant dense<0.000000e+00> : vector<8xf32>
      %72 = vector.multi_reduction <add>, %71, %cst_46 [1] : vector<8x256xf32> to vector<8xf32>
      %73 = vector.shape_cast %72 : vector<8xf32> to vector<8x1xf32>
      %cst_47 = arith.constant 2.560000e+02 : f32
      %74 = vector.broadcast %cst_47 : f32 to vector<8x1xf32>
      %75 = arith.divf %73, %74 : vector<8x1xf32>
      %76 = vector.broadcast %68 : vector<8x1xf32> to vector<8x256xf32>
      %77 = arith.subf %60, %76 : vector<8x256xf32>
      %cst_48 = arith.constant 9.99999974E-6 : f32
      %78 = vector.broadcast %cst_48 : f32 to vector<8x1xf32>
      %79 = arith.addf %75, %78 : vector<8x1xf32>
      %80 = math.rsqrt %79 : vector<8x1xf32>
      %81 = vector.broadcast %80 : vector<8x1xf32> to vector<8x256xf32>
      %82 = arith.mulf %77, %81 : vector<8x256xf32>
      %83 = vector.shape_cast %62 : vector<256xf32> to vector<1x256xf32>
      %84 = vector.broadcast %83 : vector<1x256xf32> to vector<8x256xf32>
      %85 = arith.mulf %82, %84 : vector<8x256xf32>
      %86 = vector.shape_cast %64 : vector<256xf32> to vector<1x256xf32>
      %87 = vector.broadcast %86 : vector<1x256xf32> to vector<8x256xf32>
      %88 = arith.addf %85, %87 : vector<8x256xf32>
      %89 = arith.truncf %88 : vector<8x256xf32> to vector<8x256xbf16>
      %c0_49 = arith.constant 0 : index
      %c0_50 = arith.constant 0 : index
      %90 = vector.load %arg12[%c0_49, %c0_50] : memref<8x256xbf16, #tpu.memory_space<vmem>>, vector<8x256xbf16>
      tpu.vector_store %arg12[%c0_49, %c0_50], %89 {strides = array<i32>} : memref<8x256xbf16, #tpu.memory_space<vmem>>, vector<8x256xbf16>,
    } else {
    }
    %c0 = arith.constant 0 : index
    %c0_1 = arith.constant 0 : index
    %c0_2 = arith.constant 0 : index
    %3 = vector.load %arg8[%c0, %c0_1, %c0_2] : memref<1x256x768xbf16, #tpu.memory_space<vmem>>, vector<1x256x768xbf16>
    %4 = vector.shape_cast %3 : vector<1x256x768xbf16> to vector<256x768xbf16>
    %c0_3 = arith.constant 0 : index
    %c0_4 = arith.constant 0 : index
    %5 = vector.load %arg12[%c0_3, %c0_4] : memref<8x256xbf16, #tpu.memory_space<vmem>>, vector<8x256xbf16>
    %cst = arith.constant dense<0.000000e+00> : vector<8x768xf32>
    %6 = tpu.matmul %5, %4, %cst {dimension_numbers = #tpu.dot_dimension_numbers<[1], [0], [0], [1], [0, 0, 1, 1], [], []>} : vector<8x256xbf16>, vector<256x768xbf16>, vector<8x768xf32> -> vector<8x768xf32>
    %c0_5 = arith.constant 0 : index
    %c0_6 = arith.constant 0 : index
    %7 = vector.load %arg4[%c0_5, %c0_6] : memref<8x128xf32, #tpu.memory_space<vmem>>, vector<8x128xf32>
    %c0_7 = arith.constant 0 : index
    %c0_8 = arith.constant 0 : index
    %8 = vector.load %arg5[%c0_7, %c0_8] : memref<8x128xf32, #tpu.memory_space<vmem>>, vector<8x128xf32>
    %9 = vector.extract_strided_slice %6 {offsets = [0, 0], sizes = [8, 128], strides = [1, 1]} : vector<8x768xf32> to vector<8x128xf32>
    %10 = vector.extract_strided_slice %6 {offsets = [0, 128], sizes = [8, 128], strides = [1, 1]} : vector<8x768xf32> to vector<8x128xf32>
    %11 = vector.extract_strided_slice %6 {offsets = [0, 256], sizes = [8, 128], strides = [1, 1]} : vector<8x768xf32> to vector<8x128xf32>
    %12 = arith.mulf %9, %7 : vector<8x128xf32>
    %c64_i32 = arith.constant 64 : i32
    %13 = tpu.dynamic_rotate %9 by %c64_i32 dim 1 : vector<8x128xf32>, i32 -> vector<8x128xf32>
    %14 = arith.mulf %13, %8 : vector<8x128xf32>
    %15 = arith.addf %12, %14 : vector<8x128xf32>
    %cst_9 = arith.constant 0.0883883461 : f32
    %16 = vector.broadcast %cst_9 : f32 to vector<8x128xf32>
    %17 = arith.mulf %15, %16 : vector<8x128xf32>
    %18 = arith.truncf %17 : vector<8x128xf32> to vector<8x128xbf16>
    %c0_10 = arith.constant 0 : index
    %c0_11 = arith.constant 0 : index
    %c0_12 = arith.constant 0 : index
    %c0_13 = arith.constant 0 : index
    %19 = vector.load %arg9[%c0_10, %c0_11, %c0_12, %c0_13] : memref<1x2x8x128xbf16, #tpu.memory_space<vmem>>, vector<1x1x8x128xbf16>
    %20 = vector.shape_cast %19 : vector<1x1x8x128xbf16> to vector<8x128xbf16>
    %21 = vector.shape_cast %18 : vector<8x128xbf16> to vector<1x1x8x128xbf16>
    tpu.vector_store %arg9[%c0_10, %c0_11, %c0_12, %c0_13], %21 {strides = array<i32>} : memref<1x2x8x128xbf16, #tpu.memory_space<vmem>>, vector<1x1x8x128xbf16>,
    %22 = arith.mulf %10, %7 : vector<8x128xf32>
    %c64_i32_14 = arith.constant 64 : i32
    %23 = tpu.dynamic_rotate %10 by %c64_i32_14 dim 1 : vector<8x128xf32>, i32 -> vector<8x128xf32>
    %24 = arith.mulf %23, %8 : vector<8x128xf32>
    %25 = arith.addf %22, %24 : vector<8x128xf32>
    %26 = arith.truncf %25 : vector<8x128xf32> to vector<8x128xbf16>
    %c0_15 = arith.constant 0 : index
    %c0_16 = arith.constant 0 : index
    %c0_17 = arith.constant 0 : index
    %c0_18 = arith.constant 0 : index
    %27 = vector.load %arg10[%c0_15, %c0_16, %c0_17, %c0_18] : memref<1x2x8x128xbf16, #tpu.memory_space<vmem>>, vector<1x1x8x128xbf16>
    %28 = vector.shape_cast %27 : vector<1x1x8x128xbf16> to vector<8x128xbf16>
    %29 = vector.shape_cast %26 : vector<8x128xbf16> to vector<1x1x8x128xbf16>
    tpu.vector_store %arg10[%c0_15, %c0_16, %c0_17, %c0_18], %29 {strides = array<i32>} : memref<1x2x8x128xbf16, #tpu.memory_space<vmem>>, vector<1x1x8x128xbf16>,
    %30 = arith.truncf %11 : vector<8x128xf32> to vector<8x128xbf16>
    %c0_19 = arith.constant 0 : index
    %c0_20 = arith.constant 0 : index
    %c0_21 = arith.constant 0 : index
    %c0_22 = arith.constant 0 : index
    %31 = vector.load %arg11[%c0_19, %c0_20, %c0_21, %c0_22] : memref<1x2x8x128xbf16, #tpu.memory_space<vmem>>, vector<1x1x8x128xbf16>
    %32 = vector.shape_cast %31 : vector<1x1x8x128xbf16> to vector<8x128xbf16>
    %33 = vector.shape_cast %30 : vector<8x128xbf16> to vector<1x1x8x128xbf16>
    tpu.vector_store %arg11[%c0_19, %c0_20, %c0_21, %c0_22], %33 {strides = array<i32>} : memref<1x2x8x128xbf16, #tpu.memory_space<vmem>>, vector<1x1x8x128xbf16>,
    %34 = vector.extract_strided_slice %6 {offsets = [0, 384], sizes = [8, 128], strides = [1, 1]} : vector<8x768xf32> to vector<8x128xf32>
    %35 = vector.extract_strided_slice %6 {offsets = [0, 512], sizes = [8, 128], strides = [1, 1]} : vector<8x768xf32> to vector<8x128xf32>
    %36 = vector.extract_strided_slice %6 {offsets = [0, 640], sizes = [8, 128], strides = [1, 1]} : vector<8x768xf32> to vector<8x128xf32>
    %37 = arith.mulf %34, %7 : vector<8x128xf32>
    %c64_i32_23 = arith.constant 64 : i32
    %38 = tpu.dynamic_rotate %34 by %c64_i32_23 dim 1 : vector<8x128xf32>, i32 -> vector<8x128xf32>
    %39 = arith.mulf %38, %8 : vector<8x128xf32>
    %40 = arith.addf %37, %39 : vector<8x128xf32>
    %cst_24 = arith.constant 0.0883883461 : f32
    %41 = vector.broadcast %cst_24 : f32 to vector<8x128xf32>
    %42 = arith.mulf %40, %41 : vector<8x128xf32>
    %43 = arith.truncf %42 : vector<8x128xf32> to vector<8x128xbf16>
    %c0_25 = arith.constant 0 : index
    %c1 = arith.constant 1 : index
    %c0_26 = arith.constant 0 : index
    %c0_27 = arith.constant 0 : index
    %44 = vector.load %arg9[%c0_25, %c1, %c0_26, %c0_27] : memref<1x2x8x128xbf16, #tpu.memory_space<vmem>>, vector<1x1x8x128xbf16>
    %45 = vector.shape_cast %44 : vector<1x1x8x128xbf16> to vector<8x128xbf16>
    %46 = vector.shape_cast %43 : vector<8x128xbf16> to vector<1x1x8x128xbf16>
    tpu.vector_store %arg9[%c0_25, %c1, %c0_26, %c0_27], %46 {strides = array<i32>} : memref<1x2x8x128xbf16, #tpu.memory_space<vmem>>, vector<1x1x8x128xbf16>,
    %47 = arith.mulf %35, %7 : vector<8x128xf32>
    %c64_i32_28 = arith.constant 64 : i32
    %48 = tpu.dynamic_rotate %35 by %c64_i32_28 dim 1 : vector<8x128xf32>, i32 -> vector<8x128xf32>
    %49 = arith.mulf %48, %8 : vector<8x128xf32>
    %50 = arith.addf %47, %49 : vector<8x128xf32>
    %51 = arith.truncf %50 : vector<8x128xf32> to vector<8x128xbf16>
    %c0_29 = arith.constant 0 : index
    %c1_30 = arith.constant 1 : index
    %c0_31 = arith.constant 0 : index
    %c0_32 = arith.constant 0 : index
    %52 = vector.load %arg10[%c0_29, %c1_30, %c0_31, %c0_32] : memref<1x2x8x128xbf16, #tpu.memory_space<vmem>>, vector<1x1x8x128xbf16>
    %53 = vector.shape_cast %52 : vector<1x1x8x128xbf16> to vector<8x128xbf16>
    %54 = vector.shape_cast %51 : vector<8x128xbf16> to vector<1x1x8x128xbf16>
    tpu.vector_store %arg10[%c0_29, %c1_30, %c0_31, %c0_32], %54 {strides = array<i32>} : memref<1x2x8x128xbf16, #tpu.memory_space<vmem>>, vector<1x1x8x128xbf16>,
    %55 = arith.truncf %36 : vector<8x128xf32> to vector<8x128xbf16>
    %c0_33 = arith.constant 0 : index
    %c1_34 = arith.constant 1 : index
    %c0_35 = arith.constant 0 : index
    %c0_36 = arith.constant 0 : index
    %56 = vector.load %arg11[%c0_33, %c1_34, %c0_35, %c0_36] : memref<1x2x8x128xbf16, #tpu.memory_space<vmem>>, vector<1x1x8x128xbf16>
    %57 = vector.shape_cast %56 : vector<1x1x8x128xbf16> to vector<8x128xbf16>
    %58 = vector.shape_cast %55 : vector<8x128xbf16> to vector<1x1x8x128xbf16>
    tpu.vector_store %arg11[%c0_33, %c1_34, %c0_35, %c0_36], %58 {strides = array<i32>} : memref<1x2x8x128xbf16, #tpu.memory_space<vmem>>, vector<1x1x8x128xbf16>,
    return
  }
  func.func @transform_0(%arg0: i32, %arg1: i32, %arg2: i32) -> (i32, i32, i32) {
    %c0_i32 = arith.constant 0 : i32
    %c0_i32_0 = arith.constant 0 : i32
    return %arg0, %arg1, %c0_i32 : i32, i32, i32
  }
  func.func @transform_1(%arg0: i32, %arg1: i32, %arg2: i32) -> (i32, i32) {
    %c0_i32 = arith.constant 0 : i32
    %c0_i32_0 = arith.constant 0 : i32
    return %arg1, %c0_i32 : i32, i32
  }
  func.func @transform_2(%arg0: i32, %arg1: i32, %arg2: i32) -> (i32, i32) {
    %c0_i32 = arith.constant 0 : i32
    %c0_i32_0 = arith.constant 0 : i32
    return %arg1, %c0_i32 : i32, i32
  }
  func.func @transform_3(%arg0: i32, %arg1: i32, %arg2: i32) -> (i32, i32) {
    %c0_i32 = arith.constant 0 : i32
    %c0_i32_0 = arith.constant 0 : i32
    %c0_i32_1 = arith.constant 0 : i32
    return %c0_i32, %c0_i32_0 : i32, i32
  }
  func.func @transform_4(%arg0: i32, %arg1: i32, %arg2: i32) -> (i32, i32) {
    %c0_i32 = arith.constant 0 : i32
    %c0_i32_0 = arith.constant 0 : i32
    %c0_i32_1 = arith.constant 0 : i32
    return %c0_i32, %c0_i32_0 : i32, i32
  }
  func.func @transform_5(%arg0: i32, %arg1: i32, %arg2: i32) -> (i32, i32, i32) {
    %c0_i32 = arith.constant 0 : i32
    %c0_i32_0 = arith.constant 0 : i32
    %c0_i32_1 = arith.constant 0 : i32
    return %arg2, %c0_i32, %c0_i32_0 : i32, i32, i32
  }
  func.func @transform_6(%arg0: i32, %arg1: i32, %arg2: i32) -> (i32, i32, i32, i32) {
    %c0_i32 = arith.constant 0 : i32
    %c0_i32_0 = arith.constant 0 : i32
    return %arg0, %arg2, %arg1, %c0_i32 : i32, i32, i32, i32
  }
  func.func @transform_7(%arg0: i32, %arg1: i32, %arg2: i32) -> (i32, i32, i32, i32) {
    %c0_i32 = arith.constant 0 : i32
    %c0_i32_0 = arith.constant 0 : i32
    return %arg0, %arg2, %arg1, %c0_i32 : i32, i32, i32, i32
  }
  func.func @transform_8(%arg0: i32, %arg1: i32, %arg2: i32) -> (i32, i32, i32, i32) {
    %c0_i32 = arith.constant 0 : i32
    %c0_i32_0 = arith.constant 0 : i32
    return %arg0, %arg2, %arg1, %c0_i32 : i32, i32, i32, i32
  }
}

</mosaic_0001>

<llo_original>
// kernel: tpu_custom_call.1
$region0: #{tpu_custom_call.1}
  #allocation0 [shape = 'u32[]', space=smem, size = 0x4, offset = 0x4, fixed_abs, tag = 'smem constant byte address 0x4 - core index']
  #allocation1 [shape = 'u32[72,128]{1,0:T(1,128)}', space=vmem, size = 0x9000, scoped, tag = 'internal scratch']
  #allocation2 [shape = 'bf16[8,256]{1,0:T(8,128)(2,1)}', space=vmem, size = 0x1000, scoped, tag = 'scratch operand']
  %s0 = inlined_call_operand.hbm [shape: f32[2,8,256], index: 0, kind: input, shape index: {}]
  %s1 = inlined_call_operand.hbm [shape: f32[8,128], index: 1, kind: input, shape index: {}]
  %s2 = inlined_call_operand.hbm [shape: f32[8,128], index: 2, kind: input, shape index: {}]
  %s3 = inlined_call_operand.vmem [shape: f32[1,256], index: 3, kind: input, shape index: {}]
  %s4 = inlined_call_operand.hbm [shape: f32[1,256], index: 4, kind: input, shape index: {}]
  %s5 = inlined_call_operand.hbm [shape: bf16[1,256,768], index: 5, kind: input, shape index: {}]
  %s6 = inlined_call_operand.hbm [shape: bf16[2,2,8,128], index: 6, kind: output, shape index: {0}]
  %s7 = inlined_call_operand.hbm [shape: bf16[2,2,8,128], index: 7, kind: output, shape index: {1}]
  %s8 = inlined_call_operand.hbm [shape: bf16[2,2,8,128], index: 8, kind: output, shape index: {2}]
  %9 = xla_tuple %s6, %s7, %s8
  %s10 = sld [smem:[#allocation0]]
  $region97: #{tpu_custom_call.1} parent=0
    _
  %s12 = ssub.s32 1, %s10
  %s13 = scalar_select 0, %s12, %s10
  $region1: #{tpu_custom_call.1} parent=0
    #allocation3 [shape = 'u8[16384]{0}', space=vmem, size = 0x4000, scoped, tag = 'input window, operand 0']
    #allocation4 [shape = 's32[2]{0}', space=sflag, size = 0x8, scoped, tag = 'scoped memory for tpu_custom_call.1']
    #allocation5 [shape = 's32[2]{0}', space=sflag, size = 0x8, scoped, tag = 'scoped memory for tpu_custom_call.1']
    #allocation6 [shape = 'u8[4096]{0}', space=vmem, size = 0x1000, scoped, tag = 'input window, operand 1, single buffered']
    #allocation7 [shape = 's32[1]{0}', space=sflag, size = 0x4, scoped, tag = 'scoped memory for tpu_custom_call.1']
    #allocation8 [shape = 'u8[4096]{0}', space=vmem, size = 0x1000, scoped, tag = 'input window, operand 2, single buffered']
    #allocation9 [shape = 'u8[1024]{0}', space=vmem, size = 0x400, scoped, tag = 'input window, operand 4, single buffered']
    #allocation10 [shape = 's32[1]{0}', space=sflag, size = 0x4, scoped, tag = 'scoped memory for tpu_custom_call.1']
    #allocation11 [shape = 'u8[393216]{0}', space=vmem, size = 0x60000, scoped, tag = 'input window, operand 5, single buffered']
    #allocation12 [shape = 'u8[8192]{0}', space=vmem, size = 0x2000, scoped, tag = 'output window, operand 0']
    #allocation13 [shape = 'u8[8192]{0}', space=vmem, size = 0x2000, scoped, tag = 'output window, operand 1']
    #allocation14 [shape = 's32[2]{0}', space=sflag, size = 0x8, scoped, tag = 'scoped memory for tpu_custom_call.1']
    #allocation15 [shape = 'u8[8192]{0}', space=vmem, size = 0x2000, scoped, tag = 'output window, operand 2']
    %14 = vsyncpa [#allocation4], 0
    %s15 = scalar_lea.sflag [#allocation4], 1
    %16 = vsyncpa %s15, 0
    %17 = vsyncpa [#allocation7], 0
    %18 = vsyncpa [#allocation10], 0
    %19 = vsyncpa [#allocation5], 0
    %s20 = scalar_lea.sflag [#allocation5], 1
    %21 = vsyncpa %s20, 0
    %22 = vsyncpa [#allocation14], 0
    %s23 = scalar_lea.sflag [#allocation14], 1
    %24 = vsyncpa %s23, 0
    loop: start=0, step=1, limit=4
    $region2: #{tpu_custom_call.1} parent=1 // loop_pre_header
      _
    $region3: #{tpu_custom_call.1} parent=1 // loop_header
      %s26 = sphi 0, %s30
      %p27 = scmp.ge.s32.totalorder %s26, 4
      %s33 = sphi 0, %s52
      %s34 = sphi 0, %s48
      %s35 = sphi 0, %s44
      %s36 = sphi 0, %s33
      %s37 = sphi 0, %s34
      %s38 = sphi 0, %s35
      %s39 = sphi 0, %s36
      %s40 = sphi 0, %s37
      %s41 = sphi 0, %s38
      %s57 = sphi 0, %s59
      %s60 = sphi 0, %s57
      %s61 = sphi 0, %s60
      %s77 = sphi 0, %s61
      %s83 = sphi 0, %s85
      %s86 = sphi 0, %s83
      %s87 = sphi 0, %s86
      %s103 = sphi 0, %s87
      %s109 = sphi 0, %s111
      %s112 = sphi 0, %s109
      %s113 = sphi 0, %s112
      %s129 = sphi 0, %s113
      %s133 = sphi 0, %s133
      %s135 = sphi 0, %s133
      %s136 = sphi 0, %s135
      %s150 = sphi 0, %s136
      %s154 = sphi 0, %s154
      %s156 = sphi 0, %s154
      %s157 = sphi 0, %s156
      %s171 = sphi 0, %s157
      %s177 = sphi 0, %s179
      %s180 = sphi 0, %s177
      %s181 = sphi 0, %s180
      %s197 = sphi 0, %s181
      %s207 = sphi 0, %s209
      %s210 = sphi 0, %s207
      %s211 = sphi 0, %s210
      %s227 = sphi 0, %s211
      %s237 = sphi 0, %s239
      %s240 = sphi 0, %s237
      %s241 = sphi 0, %s240
      %s257 = sphi 0, %s241
      %s267 = sphi 0, %s269
      %s270 = sphi 0, %s267
      %s271 = sphi 0, %s270
      %s287 = sphi 0, %s271
    $region4: #{tpu_custom_call.1} parent=1 // loop_header_branch
      %29 = sbr.rel (%p27) target = $region8
    $region5: #{tpu_custom_call.1} parent=1 // loop_body
      %s31 = ssub.s32 %s26, 1
      %s32 = ssub.s32 %s26, 2
      %s42 = sadd.s32 1, %s35
      %p43 = scmp.ge.s32.totalorder %s42, 1
      %s44 = scalar_select %p43, 0, %s42
      %s45 = sadd.s32 1, %s34
      %s46 = scalar_select %p43, %s45, %s34
      %p47 = scmp.ge.s32.totalorder %s46, 1
      %s48 = scalar_select %p47, 0, %s46
      %s49 = sadd.s32 1, %s33
      %s50 = scalar_select %p47, %s49, %s33
      %p51 = scmp.ge.s32.totalorder %s50, 2
      %s52 = scalar_select %p51, 0, %s50
      %s53 = ssub.s32 %s33, %s52
      %s54 = ssub.s32 %s34, %s48
      %s55 = sor.u32 %s53, %s54
      %p56 = scmp.eq.s32.totalorder %s55, 0
      %s58 = sadd.s32 %s57, 1
      %s59 = scalar_select %p56, %s57, %s58
      %p62 = pneg %p56
      %p63 = scmp.eq.s32.totalorder %s26, 1
      %p64 = por %p62, %p63
      %p65 = scmp.ne.s32.totalorder %s57, %s60
      %p66 = scmp.eq.s32.totalorder %s26, 0
      %p67 = por %p65, %p66
      %p68 = scmp.ne.s32.totalorder %s57, %s60
      %p69 = scmp.eq.s32.totalorder %s31, 1
      %p70 = por %p68, %p69
      %p71 = scmp.ne.s32.totalorder %s60, %s61
      %p72 = scmp.eq.s32.totalorder %s31, 0
      %p73 = por %p71, %p72
      %p74 = scmp.ne.s32.totalorder %s60, %s61
      %p75 = scmp.eq.s32.totalorder %s32, 1
      %p76 = por %p74, %p75
      %p78 = scmp.ne.s32.totalorder %s61, %s77
      %p79 = scmp.eq.s32.totalorder %s32, 0
      %p80 = por %p78, %p79
      %s81 = ssub.s32 %s34, %s48
      %p82 = scmp.eq.s32.totalorder %s81, 0
      %s84 = sadd.s32 %s83, 1
      %s85 = scalar_select %p82, %s83, %s84
      %p88 = pneg %p82
      %p89 = scmp.eq.s32.totalorder %s26, 1
      %p90 = por %p88, %p89
      %p91 = scmp.ne.s32.totalorder %s83, %s86
      %p92 = scmp.eq.s32.totalorder %s26, 0
      %p93 = por %p91, %p92
      %p94 = scmp.ne.s32.totalorder %s83, %s86
      %p95 = scmp.eq.s32.totalorder %s31, 1
      %p96 = por %p94, %p95
      %p97 = scmp.ne.s32.totalorder %s86, %s87
      %p98 = scmp.eq.s32.totalorder %s31, 0
      %p99 = por %p97, %p98
      %p100 = scmp.ne.s32.totalorder %s86, %s87
      %p101 = scmp.eq.s32.totalorder %s32, 1
      %p102 = por %p100, %p101
      %p104 = scmp.ne.s32.totalorder %s87, %s103
      %p105 = scmp.eq.s32.totalorder %s32, 0
      %p106 = por %p104, %p105
      %s107 = ssub.s32 %s34, %s48
      %p108 = scmp.eq.s32.totalorder %s107, 0
      %s110 = sadd.s32 %s109, 1
      %s111 = scalar_select %p108, %s109, %s110
      %p114 = pneg %p108
      %p115 = scmp.eq.s32.totalorder %s26, 1
      %p116 = por %p114, %p115
      %p117 = scmp.ne.s32.totalorder %s109, %s112
      %p118 = scmp.eq.s32.totalorder %s26, 0
      %p119 = por %p117, %p118
      %p120 = scmp.ne.s32.totalorder %s109, %s112
      %p121 = scmp.eq.s32.totalorder %s31, 1
      %p122 = por %p120, %p121
      %p123 = scmp.ne.s32.totalorder %s112, %s113
      %p124 = scmp.eq.s32.totalorder %s31, 0
      %p125 = por %p123, %p124
      %p126 = scmp.ne.s32.totalorder %s112, %s113
      %p127 = scmp.eq.s32.totalorder %s32, 1
      %p128 = por %p126, %p127
      %p130 = scmp.ne.s32.totalorder %s113, %s129
      %p131 = scmp.eq.s32.totalorder %s32, 0
      %p132 = por %p130, %p131
      %s134 = sadd.s32 %s133, 1
      %p137 = scmp.eq.s32.totalorder %s26, 1
      %p138 = scmp.ne.s32.totalorder %s133, %s135
      %p139 = scmp.eq.s32.totalorder %s26, 0
      %p140 = por %p138, %p139
      %p141 = scmp.ne.s32.totalorder %s133, %s135
      %p142 = scmp.eq.s32.totalorder %s31, 1
      %p143 = por %p141, %p142
      %p144 = scmp.ne.s32.totalorder %s135, %s136
      %p145 = scmp.eq.s32.totalorder %s31, 0
      %p146 = por %p144, %p145
      %p147 = scmp.ne.s32.totalorder %s135, %s136
      %p148 = scmp.eq.s32.totalorder %s32, 1
      %p149 = por %p147, %p148
      %p151 = scmp.ne.s32.totalorder %s136, %s150
      %p152 = scmp.eq.s32.totalorder %s32, 0
      %p153 = por %p151, %p152
      %s155 = sadd.s32 %s154, 1
      %p158 = scmp.eq.s32.totalorder %s26, 1
      %p159 = scmp.ne.s32.totalorder %s154, %s156
      %p160 = scmp.eq.s32.totalorder %s26, 0
      %p161 = por %p159, %p160
      %p162 = scmp.ne.s32.totalorder %s154, %s156
      %p163 = scmp.eq.s32.totalorder %s31, 1
      %p164 = por %p162, %p163
      %p165 = scmp.ne.s32.totalorder %s156, %s157
      %p166 = scmp.eq.s32.totalorder %s31, 0
      %p167 = por %p165, %p166
      %p168 = scmp.ne.s32.totalorder %s156, %s157
      %p169 = scmp.eq.s32.totalorder %s32, 1
      %p170 = por %p168, %p169
      %p172 = scmp.ne.s32.totalorder %s157, %s171
      %p173 = scmp.eq.s32.totalorder %s32, 0
      %p174 = por %p172, %p173
      %s175 = ssub.s32 %s35, %s44
      %p176 = scmp.eq.s32.totalorder %s175, 0
      %s178 = sadd.s32 %s177, 1
      %s179 = scalar_select %p176, %s177, %s178
      %p182 = pneg %p176
      %p183 = scmp.eq.s32.totalorder %s26, 1
      %p184 = por %p182, %p183
      %p185 = scmp.ne.s32.totalorder %s177, %s180
      %p186 = scmp.eq.s32.totalorder %s26, 0
      %p187 = por %p185, %p186
      %p188 = scmp.ne.s32.totalorder %s177, %s180
      %p189 = scmp.eq.s32.totalorder %s31, 1
      %p190 = por %p188, %p189
      %p191 = scmp.ne.s32.totalorder %s180, %s181
      %p192 = scmp.eq.s32.totalorder %s31, 0
      %p193 = por %p191, %p192
      %p194 = scmp.ne.s32.totalorder %s180, %s181
      %p195 = scmp.eq.s32.totalorder %s32, 1
      %p196 = por %p194, %p195
      %p198 = scmp.ne.s32.totalorder %s181, %s197
      %p199 = scmp.eq.s32.totalorder %s32, 0
      %p200 = por %p198, %p199
      %s201 = ssub.s32 %s33, %s52
      %s202 = ssub.s32 %s35, %s44
      %s203 = sor.u32 %s201, %s202
      %s204 = ssub.s32 %s34, %s48
      %s205 = sor.u32 %s203, %s204
      %p206 = scmp.eq.s32.totalorder %s205, 0
      %s208 = sadd.s32 %s207, 1
      %s209 = scalar_select %p206, %s207, %s208
      %p212 = pneg %p206
      %p213 = scmp.eq.s32.totalorder %s26, 1
      %p214 = por %p212, %p213
      %p215 = scmp.ne.s32.totalorder %s207, %s210
      %p216 = scmp.eq.s32.totalorder %s26, 0
      %p217 = por %p215, %p216
      %p218 = scmp.ne.s32.totalorder %s207, %s210
      %p219 = scmp.eq.s32.totalorder %s31, 1
      %p220 = por %p218, %p219
      %p221 = scmp.ne.s32.totalorder %s210, %s211
      %p222 = scmp.eq.s32.totalorder %s31, 0
      %p223 = por %p221, %p222
      %p224 = scmp.ne.s32.totalorder %s210, %s211
      %p225 = scmp.eq.s32.totalorder %s32, 1
      %p226 = por %p224, %p225
      %p228 = scmp.ne.s32.totalorder %s211, %s227
      %p229 = scmp.eq.s32.totalorder %s32, 0
      %p230 = por %p228, %p229
      %s231 = ssub.s32 %s33, %s52
      %s232 = ssub.s32 %s35, %s44
      %s233 = sor.u32 %s231, %s232
      %s234 = ssub.s32 %s34, %s48
      %s235 = sor.u32 %s233, %s234
      %p236 = scmp.eq.s32.totalorder %s235, 0
      %s238 = sadd.s32 %s237, 1
      %s239 = scalar_select %p236, %s237, %s238
      %p242 = pneg %p236
      %p243 = scmp.eq.s32.totalorder %s26, 1
      %p244 = por %p242, %p243
      %p245 = scmp.ne.s32.totalorder %s237, %s240
      %p246 = scmp.eq.s32.totalorder %s26, 0
      %p247 = por %p245, %p246
      %p248 = scmp.ne.s32.totalorder %s237, %s240
      %p249 = scmp.eq.s32.totalorder %s31, 1
      %p250 = por %p248, %p249
      %p251 = scmp.ne.s32.totalorder %s240, %s241
      %p252 = scmp.eq.s32.totalorder %s31, 0
      %p253 = por %p251, %p252
      %p254 = scmp.ne.s32.totalorder %s240, %s241
      %p255 = scmp.eq.s32.totalorder %s32, 1
      %p256 = por %p254, %p255
      %p258 = scmp.ne.s32.totalorder %s241, %s257
      %p259 = scmp.eq.s32.totalorder %s32, 0
      %p260 = por %p258, %p259
      %s261 = ssub.s32 %s33, %s52
      %s262 = ssub.s32 %s35, %s44
      %s263 = sor.u32 %s261, %s262
      %s264 = ssub.s32 %s34, %s48
      %s265 = sor.u32 %s263, %s264
      %p266 = scmp.eq.s32.totalorder %s265, 0
      %s268 = sadd.s32 %s267, 1
      %s269 = scalar_select %p266, %s267, %s268
      %p272 = pneg %p266
      %p273 = scmp.eq.s32.totalorder %s26, 1
      %p274 = por %p272, %p273
      %p275 = scmp.ne.s32.totalorder %s267, %s270
      %p276 = scmp.eq.s32.totalorder %s26, 0
      %p277 = por %p275, %p276
      %p278 = scmp.ne.s32.totalorder %s267, %s270
      %p279 = scmp.eq.s32.totalorder %s31, 1
      %p280 = por %p278, %p279
      %p281 = scmp.ne.s32.totalorder %s270, %s271
      %p282 = scmp.eq.s32.totalorder %s31, 0
      %p283 = por %p281, %p282
      %p284 = scmp.ne.s32.totalorder %s270, %s271
      %p285 = scmp.eq.s32.totalorder %s32, 1
      %p286 = por %p284, %p285
      %p288 = scmp.ne.s32.totalorder %s271, %s287
      %p289 = scmp.eq.s32.totalorder %s32, 0
      %p290 = por %p288, %p289
      %p291 = scmp.le.s32.totalorder 1, %s26
      %p292 = scmp.lt.s32.totalorder %s26, 3
      %p293 = pnand %p291, %p292
      %p294 = pneg %p293
      // Predicated region
      $region9: #{tpu_custom_call.1} parent=5 // pred_check
        _
      $region10: #{tpu_custom_call.1} parent=5 // pred_check_branch
        %296 = sbr.rel (%p293) target = $region12
      $region11: #{tpu_custom_call.1} parent=5 // pred_region
        %s297 = ssub.s32 %s26, 1
        // Predicated region
        $region13: #{tpu_custom_call.1} parent=11 // pred_check
          %p298 = pneg %p99
        $region14: #{tpu_custom_call.1} parent=11 // pred_check_branch
          %300 = sbr.rel (%p298) target = $region16
        $region15: #{tpu_custom_call.1} parent=11 // pred_region
          %302 = vsyncadd [#allocation7], 0
          %s303 = smul.addr %s37, 8
          %s304 = scalar_lea.hbm %s1, %s303
          %s306 = sshll.u32 %s304, 4
          %s307 = int_to_ptr.hbm [resolvable:$true] %s306
          %s308 = sshll.u32 [#allocation6], 4
          %s309 = int_to_ptr.vmem [resolvable:$true] %s308
          %311 = dma.hbm_to_vmem [thread:$0]  %s307, 128, %s309, [#allocation7]
        $region16: #{tpu_custom_call.1} parent=11 // pred_fallthru
          _
        // Predicated region
        $region17: #{tpu_custom_call.1} parent=11 // pred_check
          %p312 = pneg %p125
        $region18: #{tpu_custom_call.1} parent=11 // pred_check_branch
          %314 = sbr.rel (%p312) target = $region20
        $region19: #{tpu_custom_call.1} parent=11 // pred_region
          %316 = vsyncadd [#allocation7], 0
          %s317 = smul.addr %s37, 8
          %s318 = scalar_lea.hbm %s2, %s317
          %s320 = sshll.u32 %s318, 4
          %s321 = int_to_ptr.hbm [resolvable:$true] %s320
          %s322 = sshll.u32 [#allocation8], 4
          %s323 = int_to_ptr.vmem [resolvable:$true] %s322
          %325 = dma.hbm_to_vmem [thread:$0]  %s321, 128, %s323, [#allocation7]
        $region20: #{tpu_custom_call.1} parent=11 // pred_fallthru
          _
        // Predicated region
        $region21: #{tpu_custom_call.1} parent=11 // pred_check
          %p326 = pneg %p146
        $region22: #{tpu_custom_call.1} parent=11 // pred_check_branch
          %328 = sbr.rel (%p326) target = $region24
        $region23: #{tpu_custom_call.1} parent=11 // pred_region
          _
        $region24: #{tpu_custom_call.1} parent=11 // pred_fallthru
          _
        // Predicated region
        $region25: #{tpu_custom_call.1} parent=11 // pred_check
          %p329 = pneg %p167
        $region26: #{tpu_custom_call.1} parent=11 // pred_check_branch
          %331 = sbr.rel (%p329) target = $region28
        $region27: #{tpu_custom_call.1} parent=11 // pred_region
          %333 = vsyncadd [#allocation10], 0
          %s335 = sshll.u32 %s4, 4
          %s336 = int_to_ptr.hbm [resolvable:$true] %s335
          %s337 = sshll.u32 [#allocation9], 4
          %s338 = int_to_ptr.vmem [resolvable:$true] %s337
          %340 = dma.hbm_to_vmem [thread:$0]  %s336, 32, %s338, [#allocation10]
        $region28: #{tpu_custom_call.1} parent=11 // pred_fallthru
          _
        // Predicated region
        $region29: #{tpu_custom_call.1} parent=11 // pred_check
          %p341 = pneg %p193
        $region30: #{tpu_custom_call.1} parent=11 // pred_check_branch
          %343 = sbr.rel (%p341) target = $region32
        $region31: #{tpu_custom_call.1} parent=11 // pred_region
          %345 = vsyncadd [#allocation10], 0
          %s346 = smul.addr %s38, 192
          %s347 = smul.addr %s346, 4
          %s348 = scalar_lea.hbm %s5, %s347
          %s349 = sshll.u32 %s348, 4
          %s350 = int_to_ptr.hbm [resolvable:$true] %s349
          %s351 = sshll.u32 [#allocation11], 4
          %s352 = int_to_ptr.vmem [resolvable:$true] %s351
          %357 = dma.hbm_to_vmem [thread:$0]  %s350, 12288, %s352, [#allocation10], 384, 384, 24
        $region32: #{tpu_custom_call.1} parent=11 // pred_fallthru
          _
      $region12: #{tpu_custom_call.1} parent=5 // pred_fallthru
        _
      %p358 = scmp.lt.s32.totalorder %s26, 2
      // Predicated region
      $region33: #{tpu_custom_call.1} parent=5 // pred_check
        %p359 = pneg %p358
      $region34: #{tpu_custom_call.1} parent=5 // pred_check_branch
        %361 = sbr.rel (%p359) target = $region36
      $region35: #{tpu_custom_call.1} parent=5 // pred_region
        // Predicated region
        $region37: #{tpu_custom_call.1} parent=35 // pred_check
          %p362 = pneg %p67
        $region38: #{tpu_custom_call.1} parent=35 // pred_check_branch
          %364 = sbr.rel (%p362) target = $region40
        $region39: #{tpu_custom_call.1} parent=35 // pred_region
          %s365 = sand.u32 %s57, 1
          %s366 = scalar_lea.sflag [#allocation4], %s365
          %s367 = sand.u32 %s57, 1
          %s368 = smul.addr %s367, 16
          %s369 = scalar_lea.vmem [#allocation3], %s368
          %371 = vsyncadd %s366, 0
          %s372 = smul.addr %s34, 2
          %s373 = smul.addr %s33, 2
          %s374 = sadd.s32 %s372, %s373
          %s375 = smul.addr %s374, 8
          %s376 = scalar_lea.hbm %s0, %s375
          %s378 = sshll.u32 %s376, 4
          %s379 = int_to_ptr.hbm [resolvable:$true] %s378
          %s380 = sshll.u32 %s369, 4
          %s381 = int_to_ptr.vmem [resolvable:$true] %s380
          %383 = dma.hbm_to_vmem [thread:$0]  %s379, 256, %s381, %s366
        $region40: #{tpu_custom_call.1} parent=35 // pred_fallthru
          _
      $region36: #{tpu_custom_call.1} parent=5 // pred_fallthru
        _
      %p384 = scmp.le.s32.totalorder 1, %s26
      %p385 = scmp.lt.s32.totalorder %s26, 3
      %p386 = pnand %p384, %p385
      %p387 = pneg %p386
      // Predicated region
      $region41: #{tpu_custom_call.1} parent=5 // pred_check
        _
      $region42: #{tpu_custom_call.1} parent=5 // pred_check_branch
        %389 = sbr.rel (%p386) target = $region44
      $region43: #{tpu_custom_call.1} parent=5 // pred_region
        %s390 = ssub.s32 %s26, 1
        %s391 = sand.u32 %s60, 1
        %s392 = scalar_lea.sflag [#allocation4], %s391
        %s393 = sand.u32 %s60, 1
        %s394 = smul.addr %s393, 16
        %s395 = scalar_lea.vmem [#allocation3], %s394
        // Predicated region
        $region45: #{tpu_custom_call.1} parent=43 // pred_check
          %p396 = pneg %p73
        $region46: #{tpu_custom_call.1} parent=43 // pred_check_branch
          %398 = sbr.rel (%p396) target = $region48
        $region47: #{tpu_custom_call.1} parent=43 // pred_region
          %400 = dma.done %s392, 256
        $region48: #{tpu_custom_call.1} parent=43 // pred_fallthru
          _
        // Predicated region
        $region49: #{tpu_custom_call.1} parent=43 // pred_check
          %p401 = pneg %p99
        $region50: #{tpu_custom_call.1} parent=43 // pred_check_branch
          %403 = sbr.rel (%p401) target = $region52
        $region51: #{tpu_custom_call.1} parent=43 // pred_region
          %405 = dma.done [#allocation7], 128
        $region52: #{tpu_custom_call.1} parent=43 // pred_fallthru
          _
        // Predicated region
        $region53: #{tpu_custom_call.1} parent=43 // pred_check
          %p406 = pneg %p125
        $region54: #{tpu_custom_call.1} parent=43 // pred_check_branch
          %408 = sbr.rel (%p406) target = $region56
        $region55: #{tpu_custom_call.1} parent=43 // pred_region
          %410 = dma.done [#allocation7], 128
        $region56: #{tpu_custom_call.1} parent=43 // pred_fallthru
          _
        // Predicated region
        $region57: #{tpu_custom_call.1} parent=43 // pred_check
          %p411 = pneg %p167
        $region58: #{tpu_custom_call.1} parent=43 // pred_check_branch
          %413 = sbr.rel (%p411) target = $region60
        $region59: #{tpu_custom_call.1} parent=43 // pred_region
          %415 = dma.done [#allocation10], 32
        $region60: #{tpu_custom_call.1} parent=43 // pred_fallthru
          _
        // Predicated region
        $region61: #{tpu_custom_call.1} parent=43 // pred_check
          %p416 = pneg %p193
        $region62: #{tpu_custom_call.1} parent=43 // pred_check_branch
          %418 = sbr.rel (%p416) target = $region64
        $region63: #{tpu_custom_call.1} parent=43 // pred_region
          %420 = dma.done [#allocation10], 12288
        $region64: #{tpu_custom_call.1} parent=43 // pred_fallthru
          _
        %s421 = sand.u32 %s60, 1
        %s422 = scalar_lea.sflag [#allocation4], %s421
        %s423 = sand.u32 %s60, 1
        %s424 = smul.addr %s423, 16
        %s425 = scalar_lea.vmem [#allocation3], %s424
        %p426 = pneg %p73
        %p427 = pneg %p70
        %p428 = pneg %p99
        %p429 = pneg %p96
        %p430 = pneg %p125
        %p431 = pneg %p122
        %p432 = pneg %p146
        %p433 = pneg %p143
        %p434 = pneg %p167
        %p435 = pneg %p164
        %p436 = pneg %p193
        %p437 = pneg %p190
        %p438 = pneg %p223
        %p439 = pneg %p220
        %s440 = sand.u32 %s210, 1
        %s441 = scalar_lea.sflag [#allocation5], %s440
        %s442 = sand.u32 %s210, 1
        %s443 = smul.addr %s442, 8
        %s444 = scalar_lea.vmem [#allocation12], %s443
        %p445 = pneg %p253
        %p446 = pneg %p250
        %s447 = sand.u32 %s31, 1
        %s448 = scalar_lea.sflag [#allocation14], %s447
        %s449 = sand.u32 %s240, 1
        %s450 = smul.addr %s449, 8
        %s451 = scalar_lea.vmem [#allocation13], %s450
        %p452 = pneg %p283
        %p453 = pneg %p280
        %s454 = sand.u32 %s31, 1
        %s455 = scalar_lea.sflag [#allocation14], %s454
        %s456 = sand.u32 %s270, 1
        %s457 = smul.addr %s456, 8
        %s458 = scalar_lea.vmem [#allocation15], %s457
        %s459 = smul.u32 2, %s38
        %s460 = smul.u32 2, %s38
        %s461 = smul.u32 2, %s38
        %p462 = scmp.eq.s32.totalorder %s38, 0
        // Predicated region
        $region65: #{tpu_custom_call.1} parent=43 // pred_check
          %p463 = pneg %p462
        $region66: #{tpu_custom_call.1} parent=43 // pred_check_branch
          %465 = sbr.rel (%p463) target = $region68
        $region67: #{tpu_custom_call.1} parent=43 // pred_region
          %v466 = vld [vmem:[%s395] sm:$0xff]
          %v467 = vld [vmem:[%s395 + $0x8] sm:$0xff]
          %v468 = vld [vmem:[%s3] sm:$0x3]
          %v469 = vld [vmem:[#allocation9] sm:$0x3]
          %v470 = vadd.f32 %v466, %v467
          %471 = vadd.xlane.f32.xlu0 %v470
          %v472 = vpop.xlane.xlu0 %471
          %v473 = vrcp.pop 256.0
          %v474 = vmul.f32 256.0, %v473
          %v475 = vsub.f32 1.0, %v474
          %v476 = vmul.f32 %v473, %v475
          %v477 = vadd.f32 %v473, %v476
          %vm478 = vweird.f32 %v473
          %v479 = vsel %vm478, %v473, %v477
          %v480 = vmul.f32 %v472, %v479
          %v481 = vsub.f32 %v466, %v480
          %v482 = vsub.f32 %v467, %v480
          %v483 = vmul.f32 %v481, %v481
          %v484 = vmul.f32 %v482, %v482
          %v485 = vadd.f32 %v483, %v484
          %486 = vadd.xlane.f32.xlu0 %v485
          %v487 = vpop.xlane.xlu0 %486
          %v488 = vmul.f32 %v487, %v479
          %v489 = vadd.f32 %v488, 1e-05
          %v490 = vrsqrt.pop %v489
          %v491 = vmul.f32 %v490, %v489
          %v492 = vmul.f32 %v491, %v490
          %v493 = vmul.f32 0.5, %v492
          %v494 = vsub.f32 1.5, %v493
          %v495 = vmul.f32 %v490, %v494
          %vm496 = vweird.f32 %v489
          %vm497 = vweird.f32 %v490
          %vm498 = vmor %vm496, %vm497
          %v499 = vsel %vm498, %v490, %v495
          %v500 = vmul.f32 %v481, %v499
          %v501 = vmul.f32 %v482, %v499
          %v503 = vperm.slane %v468, 0
          %v504 = vperm.slane %v468, 1
          %v507 = vmul.f32 %v500, %v503
          %v508 = vmul.f32 %v501, %v504
          %v510 = vperm.slane %v469, 0
          %v511 = vperm.slane %v469, 1
          %v514 = vadd.f32 %v507, %v510
          %v515 = vadd.f32 %v508, %v511
          %v516 = vpack.c.bf16 %v515, %v514
          %517 = vst [vmem:[#allocation2] sm:$0xff] %v516
        $region68: #{tpu_custom_call.1} parent=43 // pred_fallthru
          _
        %v518 = vld [vmem:[#allocation11] sm:$0xff]
        %v519 = vld [vmem:[#allocation11 + $0x8] sm:$0xff]
        %v520 = vld [vmem:[#allocation11 + $0x10] sm:$0xff]
        %v521 = vld [vmem:[#allocation11 + $0x18] sm:$0xff]
        %v522 = vld [vmem:[#allocation11 + $0x20] sm:$0xff]
        %v523 = vld [vmem:[#allocation11 + $0x28] sm:$0xff]
        %v524 = vld [vmem:[#allocation11 + $0x30] sm:$0xff]
        %v525 = vld [vmem:[#allocation11 + $0x38] sm:$0xff]
        %v526 = vld [vmem:[#allocation11 + $0x40] sm:$0xff]
        %v527 = vld [vmem:[#allocation11 + $0x48] sm:$0xff]
        %v528 = vld [vmem:[#allocation11 + $0x50] sm:$0xff]
        %v529 = vld [vmem:[#allocation11 + $0x58] sm:$0xff]
        %v530 = vld [vmem:[#allocation11 + $0x60] sm:$0xff]
        %v531 = vld [vmem:[#allocation11 + $0x68] sm:$0xff]
        %v532 = vld [vmem:[#allocation11 + $0x70] sm:$0xff]
        %v533 = vld [vmem:[#allocation11 + $0x78] sm:$0xff]
        %v534 = vld [vmem:[#allocation11 + $0x80] sm:$0xff]
        %v535 = vld [vmem:[#allocation11 + $0x88] sm:$0xff]
        %v536 = vld [vmem:[#allocation11 + $0x90] sm:$0xff]
        %v537 = vld [vmem:[#allocation11 + $0x98] sm:$0xff]
        %v538 = vld [vmem:[#allocation11 + $0xa0] sm:$0xff]
        %v539 = vld [vmem:[#allocation11 + $0xa8] sm:$0xff]
        %v540 = vld [vmem:[#allocation11 + $0xb0] sm:$0xff]
        %v541 = vld [vmem:[#allocation11 + $0xb8] sm:$0xff]
        %v542 = vld [vmem:[#allocation11 + $0xc0] sm:$0xff]
        %v543 = vld [vmem:[#allocation11 + $0xc8] sm:$0xff]
        %v544 = vld [vmem:[#allocation11 + $0xd0] sm:$0xff]
        %v545 = vld [vmem:[#allocation11 + $0xd8] sm:$0xff]
        %v546 = vld [vmem:[#allocation11 + $0xe0] sm:$0xff]
        %v547 = vld [vmem:[#allocation11 + $0xe8] sm:$0xff]
        %v548 = vld [vmem:[#allocation11 + $0xf0] sm:$0xff]
        %v549 = vld [vmem:[#allocation11 + $0xf8] sm:$0xff]
        %v550 = vld [vmem:[#allocation11 + $0x100] sm:$0xff]
        %v551 = vld [vmem:[#allocation11 + $0x108] sm:$0xff]
        %v552 = vld [vmem:[#allocation11 + $0x110] sm:$0xff]
        %v553 = vld [vmem:[#allocation11 + $0x118] sm:$0xff]
        %v554 = vld [vmem:[#allocation11 + $0x120] sm:$0xff]
        %v555 = vld [vmem:[#allocation11 + $0x128] sm:$0xff]
        %v556 = vld [vmem:[#allocation11 + $0x130] sm:$0xff]
        %v557 = vld [vmem:[#allocation11 + $0x138] sm:$0xff]
        %v558 = vld [vmem:[#allocation11 + $0x140] sm:$0xff]
        %v559 = vld [vmem:[#allocation11 + $0x148] sm:$0xff]
        %v560 = vld [vmem:[#allocation11 + $0x150] sm:$0xff]
        %v561 = vld [vmem:[#allocation11 + $0x158] sm:$0xff]
        %v562 = vld [vmem:[#allocation11 + $0x160] sm:$0xff]
        %v563 = vld [vmem:[#allocation11 + $0x168] sm:$0xff]
        %v564 = vld [vmem:[#allocation11 + $0x170] sm:$0xff]
        %v565 = vld [vmem:[#allocation11 + $0x178] sm:$0xff]
        %v566 = vld [vmem:[#allocation11 + $0x180] sm:$0xff]
        %v567 = vld [vmem:[#allocation11 + $0x188] sm:$0xff]
        %v568 = vld [vmem:[#allocation11 + $0x190] sm:$0xff]
        %v569 = vld [vmem:[#allocation11 + $0x198] sm:$0xff]
        %v570 = vld [vmem:[#allocation11 + $0x1a0] sm:$0xff]
        %v571 = vld [vmem:[#allocation11 + $0x1a8] sm:$0xff]
        %v572 = vld [vmem:[#allocation11 + $0x1b0] sm:$0xff]
        %v573 = vld [vmem:[#allocation11 + $0x1b8] sm:$0xff]
        %v574 = vld [vmem:[#allocation11 + $0x1c0] sm:$0xff]
        %v575 = vld [vmem:[#allocation11 + $0x1c8] sm:$0xff]
        %v576 = vld [vmem:[#allocation11 + $0x1d0] sm:$0xff]
        %v577 = vld [vmem:[#allocation11 + $0x1d8] sm:$0xff]
        %v578 = vld [vmem:[#allocation11 + $0x1e0] sm:$0xff]
        %v579 = vld [vmem:[#allocation11 + $0x1e8] sm:$0xff]
        %v580 = vld [vmem:[#allocation11 + $0x1f0] sm:$0xff]
        %v581 = vld [vmem:[#allocation11 + $0x1f8] sm:$0xff]
        %v582 = vld [vmem:[#allocation11 + $0x200] sm:$0xff]
        %v583 = vld [vmem:[#allocation11 + $0x208] sm:$0xff]
        %v584 = vld [vmem:[#allocation11 + $0x210] sm:$0xff]
        %v585 = vld [vmem:[#allocation11 + $0x218] sm:$0xff]
        %v586 = vld [vmem:[#allocation11 + $0x220] sm:$0xff]
        %v587 = vld [vmem:[#allocation11 + $0x228] sm:$0xff]
        %v588 = vld [vmem:[#allocation11 + $0x230] sm:$0xff]
        %v589 = vld [vmem:[#allocation11 + $0x238] sm:$0xff]
        %v590 = vld [vmem:[#allocation11 + $0x240] sm:$0xff]
        %v591 = vld [vmem:[#allocation11 + $0x248] sm:$0xff]
        %v592 = vld [vmem:[#allocation11 + $0x250] sm:$0xff]
        %v593 = vld [vmem:[#allocation11 + $0x258] sm:$0xff]
        %v594 = vld [vmem:[#allocation11 + $0x260] sm:$0xff]
        %v595 = vld [vmem:[#allocation11 + $0x268] sm:$0xff]
        %v596 = vld [vmem:[#allocation11 + $0x270] sm:$0xff]
        %v597 = vld [vmem:[#allocation11 + $0x278] sm:$0xff]
        %v598 = vld [vmem:[#allocation11 + $0x280] sm:$0xff]
        %v599 = vld [vmem:[#allocation11 + $0x288] sm:$0xff]
        %v600 = vld [vmem:[#allocation11 + $0x290] sm:$0xff]
        %v601 = vld [vmem:[#allocation11 + $0x298] sm:$0xff]
        %v602 = vld [vmem:[#allocation11 + $0x2a0] sm:$0xff]
        %v603 = vld [vmem:[#allocation11 + $0x2a8] sm:$0xff]
        %v604 = vld [vmem:[#allocation11 + $0x2b0] sm:$0xff]
        %v605 = vld [vmem:[#allocation11 + $0x2b8] sm:$0xff]
        %v606 = vld [vmem:[#allocation11 + $0x2c0] sm:$0xff]
        %v607 = vld [vmem:[#allocation11 + $0x2c8] sm:$0xff]
        %v608 = vld [vmem:[#allocation11 + $0x2d0] sm:$0xff]
        %v609 = vld [vmem:[#allocation11 + $0x2d8] sm:$0xff]
        %v610 = vld [vmem:[#allocation11 + $0x2e0] sm:$0xff]
        %v611 = vld [vmem:[#allocation11 + $0x2e8] sm:$0xff]
        %v612 = vld [vmem:[#allocation11 + $0x2f0] sm:$0xff]
        %v613 = vld [vmem:[#allocation11 + $0x2f8] sm:$0xff]
        %v614 = vld [vmem:[#allocation2] sm:$0xff]
        %v616 = vunpack.c.l.b16 %v614
        %v617 = vunpack.c.h.b16 %v614
        %v618 = vpack.c.b16 %v616, %v616
        %v619 = vpack.c.b16 %v617, %v617
        %v718 = vunpack.c.l.b16 %v518
        %v719 = vunpack.c.h.b16 %v518
        %v720 = vunpack.c.l.b16 %v519
        %v721 = vunpack.c.h.b16 %v519
        %v722 = vunpack.c.l.b16 %v520
        %v723 = vunpack.c.h.b16 %v520
        %v724 = vunpack.c.l.b16 %v521
        %v725 = vunpack.c.h.b16 %v521
        %v726 = vunpack.c.l.b16 %v522
        %v727 = vunpack.c.h.b16 %v522
        %v728 = vunpack.c.l.b16 %v523
        %v729 = vunpack.c.h.b16 %v523
        %v730 = vunpack.c.l.b16 %v524
        %v731 = vunpack.c.h.b16 %v524
        %v732 = vunpack.c.l.b16 %v525
        %v733 = vunpack.c.h.b16 %v525
        %v734 = vunpack.c.l.b16 %v526
        %v735 = vunpack.c.h.b16 %v526
        %v736 = vunpack.c.l.b16 %v527
        %v737 = vunpack.c.h.b16 %v527
        %v738 = vunpack.c.l.b16 %v528
        %v739 = vunpack.c.h.b16 %v528
        %v740 = vunpack.c.l.b16 %v529
        %v741 = vunpack.c.h.b16 %v529
        %v742 = vunpack.c.l.b16 %v530
        %v743 = vunpack.c.h.b16 %v530
        %v744 = vunpack.c.l.b16 %v531
        %v745 = vunpack.c.h.b16 %v531
        %v746 = vunpack.c.l.b16 %v532
        %v747 = vunpack.c.h.b16 %v532
        %v748 = vunpack.c.l.b16 %v533
        %v749 = vunpack.c.h.b16 %v533
        %v750 = vunpack.c.l.b16 %v534
        %v751 = vunpack.c.h.b16 %v534
        %v752 = vunpack.c.l.b16 %v535
        %v753 = vunpack.c.h.b16 %v535
        %v754 = vunpack.c.l.b16 %v536
        %v755 = vunpack.c.h.b16 %v536
        %v756 = vunpack.c.l.b16 %v537
        %v757 = vunpack.c.h.b16 %v537
        %v758 = vunpack.c.l.b16 %v538
        %v759 = vunpack.c.h.b16 %v538
        %v760 = vunpack.c.l.b16 %v539
        %v761 = vunpack.c.h.b16 %v539
        %v762 = vunpack.c.l.b16 %v540
        %v763 = vunpack.c.h.b16 %v540
        %v764 = vunpack.c.l.b16 %v541
        %v765 = vunpack.c.h.b16 %v541
        %v766 = vunpack.c.l.b16 %v542
        %v767 = vunpack.c.h.b16 %v542
        %v768 = vunpack.c.l.b16 %v543
        %v769 = vunpack.c.h.b16 %v543
        %v770 = vunpack.c.l.b16 %v544
        %v771 = vunpack.c.h.b16 %v544
        %v772 = vunpack.c.l.b16 %v545
        %v773 = vunpack.c.h.b16 %v545
        %v774 = vunpack.c.l.b16 %v546
        %v775 = vunpack.c.h.b16 %v546
        %v776 = vunpack.c.l.b16 %v547
        %v777 = vunpack.c.h.b16 %v547
        %v778 = vunpack.c.l.b16 %v548
        %v779 = vunpack.c.h.b16 %v548
        %v780 = vunpack.c.l.b16 %v549
        %v781 = vunpack.c.h.b16 %v549
        %v782 = vunpack.c.l.b16 %v550
        %v783 = vunpack.c.h.b16 %v550
        %v784 = vunpack.c.l.b16 %v551
        %v785 = vunpack.c.h.b16 %v551
        %v786 = vunpack.c.l.b16 %v552
        %v787 = vunpack.c.h.b16 %v552
        %v788 = vunpack.c.l.b16 %v553
        %v789 = vunpack.c.h.b16 %v553
        %v790 = vunpack.c.l.b16 %v554
        %v791 = vunpack.c.h.b16 %v554
        %v792 = vunpack.c.l.b16 %v555
        %v793 = vunpack.c.h.b16 %v555
        %v794 = vunpack.c.l.b16 %v556
        %v795 = vunpack.c.h.b16 %v556
        %v796 = vunpack.c.l.b16 %v557
        %v797 = vunpack.c.h.b16 %v557
        %v798 = vunpack.c.l.b16 %v558
        %v799 = vunpack.c.h.b16 %v558
        %v800 = vunpack.c.l.b16 %v559
        %v801 = vunpack.c.h.b16 %v559
        %v802 = vunpack.c.l.b16 %v560
        %v803 = vunpack.c.h.b16 %v560
        %v804 = vunpack.c.l.b16 %v561
        %v805 = vunpack.c.h.b16 %v561
        %v806 = vunpack.c.l.b16 %v562
        %v807 = vunpack.c.h.b16 %v562
        %v808 = vunpack.c.l.b16 %v563
        %v809 = vunpack.c.h.b16 %v563
        %v810 = vunpack.c.l.b16 %v564
        %v811 = vunpack.c.h.b16 %v564
        %v812 = vunpack.c.l.b16 %v565
        %v813 = vunpack.c.h.b16 %v565
        %v814 = vunpack.c.l.b16 %v566
        %v815 = vunpack.c.h.b16 %v566
        %v816 = vunpack.c.l.b16 %v567
        %v817 = vunpack.c.h.b16 %v567
        %v818 = vunpack.c.l.b16 %v568
        %v819 = vunpack.c.h.b16 %v568
        %v820 = vunpack.c.l.b16 %v569
        %v821 = vunpack.c.h.b16 %v569
        %v822 = vunpack.c.l.b16 %v570
        %v823 = vunpack.c.h.b16 %v570
        %v824 = vunpack.c.l.b16 %v571
        %v825 = vunpack.c.h.b16 %v571
        %v826 = vunpack.c.l.b16 %v572
        %v827 = vunpack.c.h.b16 %v572
        %v828 = vunpack.c.l.b16 %v573
        %v829 = vunpack.c.h.b16 %v573
        %v830 = vunpack.c.l.b16 %v574
        %v831 = vunpack.c.h.b16 %v574
        %v832 = vunpack.c.l.b16 %v575
        %v833 = vunpack.c.h.b16 %v575
        %v834 = vunpack.c.l.b16 %v576
        %v835 = vunpack.c.h.b16 %v576
        %v836 = vunpack.c.l.b16 %v577
        %v837 = vunpack.c.h.b16 %v577
        %v838 = vunpack.c.l.b16 %v578
        %v839 = vunpack.c.h.b16 %v578
        %v840 = vunpack.c.l.b16 %v579
        %v841 = vunpack.c.h.b16 %v579
        %v842 = vunpack.c.l.b16 %v580
        %v843 = vunpack.c.h.b16 %v580
        %v844 = vunpack.c.l.b16 %v581
        %v845 = vunpack.c.h.b16 %v581
        %v846 = vunpack.c.l.b16 %v582
        %v847 = vunpack.c.h.b16 %v582
        %v848 = vunpack.c.l.b16 %v583
        %v849 = vunpack.c.h.b16 %v583
        %v850 = vunpack.c.l.b16 %v584
        %v851 = vunpack.c.h.b16 %v584
        %v852 = vunpack.c.l.b16 %v585
        %v853 = vunpack.c.h.b16 %v585
        %v854 = vunpack.c.l.b16 %v586
        %v855 = vunpack.c.h.b16 %v586
        %v856 = vunpack.c.l.b16 %v587
        %v857 = vunpack.c.h.b16 %v587
        %v858 = vunpack.c.l.b16 %v588
        %v859 = vunpack.c.h.b16 %v588
        %v860 = vunpack.c.l.b16 %v589
        %v861 = vunpack.c.h.b16 %v589
        %v862 = vunpack.c.l.b16 %v590
        %v863 = vunpack.c.h.b16 %v590
        %v864 = vunpack.c.l.b16 %v591
        %v865 = vunpack.c.h.b16 %v591
        %v866 = vunpack.c.l.b16 %v592
        %v867 = vunpack.c.h.b16 %v592
        %v868 = vunpack.c.l.b16 %v593
        %v869 = vunpack.c.h.b16 %v593
        %v870 = vunpack.c.l.b16 %v594
        %v871 = vunpack.c.h.b16 %v594
        %v872 = vunpack.c.l.b16 %v595
        %v873 = vunpack.c.h.b16 %v595
        %v874 = vunpack.c.l.b16 %v596
        %v875 = vunpack.c.h.b16 %v596
        %v876 = vunpack.c.l.b16 %v597
        %v877 = vunpack.c.h.b16 %v597
        %v878 = vunpack.c.l.b16 %v598
        %v879 = vunpack.c.h.b16 %v598
        %v880 = vunpack.c.l.b16 %v599
        %v881 = vunpack.c.h.b16 %v599
        %v882 = vunpack.c.l.b16 %v600
        %v883 = vunpack.c.h.b16 %v600
        %v884 = vunpack.c.l.b16 %v601
        %v885 = vunpack.c.h.b16 %v601
        %v886 = vunpack.c.l.b16 %v602
        %v887 = vunpack.c.h.b16 %v602
        %v888 = vunpack.c.l.b16 %v603
        %v889 = vunpack.c.h.b16 %v603
        %v890 = vunpack.c.l.b16 %v604
        %v891 = vunpack.c.h.b16 %v604
        %v892 = vunpack.c.l.b16 %v605
        %v893 = vunpack.c.h.b16 %v605
        %v894 = vunpack.c.l.b16 %v606
        %v895 = vunpack.c.h.b16 %v606
        %v896 = vunpack.c.l.b16 %v607
        %v897 = vunpack.c.h.b16 %v607
        %v898 = vunpack.c.l.b16 %v608
        %v899 = vunpack.c.h.b16 %v608
        %v900 = vunpack.c.l.b16 %v609
        %v901 = vunpack.c.h.b16 %v609
        %v902 = vunpack.c.l.b16 %v610
        %v903 = vunpack.c.h.b16 %v610
        %v904 = vunpack.c.l.b16 %v611
        %v905 = vunpack.c.h.b16 %v611
        %v906 = vunpack.c.l.b16 %v612
        %v907 = vunpack.c.h.b16 %v612
        %v908 = vunpack.c.l.b16 %v613
        %v909 = vunpack.c.h.b16 %v613
        %v910 = vpack.c.b16 %v724, %v718
        %v911 = vpack.c.b16 %v725, %v719
        %v912 = vpack.c.b16 %v726, %v720
        %v913 = vpack.c.b16 %v727, %v721
        %v914 = vpack.c.b16 %v728, %v722
        %v915 = vpack.c.b16 %v729, %v723
        %v916 = vpack.c.b16 %v736, %v730
        %v917 = vpack.c.b16 %v737, %v731
        %v918 = vpack.c.b16 %v738, %v732
        %v919 = vpack.c.b16 %v739, %v733
        %v920 = vpack.c.b16 %v740, %v734
        %v921 = vpack.c.b16 %v741, %v735
        %v922 = vpack.c.b16 %v748, %v742
        %v923 = vpack.c.b16 %v749, %v743
        %v924 = vpack.c.b16 %v750, %v744
        %v925 = vpack.c.b16 %v751, %v745
        %v926 = vpack.c.b16 %v752, %v746
        %v927 = vpack.c.b16 %v753, %v747
        %v928 = vpack.c.b16 %v760, %v754
        %v929 = vpack.c.b16 %v761, %v755
        %v930 = vpack.c.b16 %v762, %v756
        %v931 = vpack.c.b16 %v763, %v757
        %v932 = vpack.c.b16 %v764, %v758
        %v933 = vpack.c.b16 %v765, %v759
        %v934 = vpack.c.b16 %v772, %v766
        %v935 = vpack.c.b16 %v773, %v767
        %v936 = vpack.c.b16 %v774, %v768
        %v937 = vpack.c.b16 %v775, %v769
        %v938 = vpack.c.b16 %v776, %v770
        %v939 = vpack.c.b16 %v777, %v771
        %v940 = vpack.c.b16 %v784, %v778
        %v941 = vpack.c.b16 %v785, %v779
        %v942 = vpack.c.b16 %v786, %v780
        %v943 = vpack.c.b16 %v787, %v781
        %v944 = vpack.c.b16 %v788, %v782
        %v945 = vpack.c.b16 %v789, %v783
        %v946 = vpack.c.b16 %v796, %v790
        %v947 = vpack.c.b16 %v797, %v791
        %v948 = vpack.c.b16 %v798, %v792
        %v949 = vpack.c.b16 %v799, %v793
        %v950 = vpack.c.b16 %v800, %v794
        %v951 = vpack.c.b16 %v801, %v795
        %v952 = vpack.c.b16 %v808, %v802
        %v953 = vpack.c.b16 %v809, %v803
        %v954 = vpack.c.b16 %v810, %v804
        %v955 = vpack.c.b16 %v811, %v805
        %v956 = vpack.c.b16 %v812, %v806
        %v957 = vpack.c.b16 %v813, %v807
        %v958 = vpack.c.b16 %v820, %v814
        %v959 = vpack.c.b16 %v821, %v815
        %v960 = vpack.c.b16 %v822, %v816
        %v961 = vpack.c.b16 %v823, %v817
        %v962 = vpack.c.b16 %v824, %v818
        %v963 = vpack.c.b16 %v825, %v819
        %v964 = vpack.c.b16 %v832, %v826
        %v965 = vpack.c.b16 %v833, %v827
        %v966 = vpack.c.b16 %v834, %v828
        %v967 = vpack.c.b16 %v835, %v829
        %v968 = vpack.c.b16 %v836, %v830
        %v969 = vpack.c.b16 %v837, %v831
        %v970 = vpack.c.b16 %v844, %v838
        %v971 = vpack.c.b16 %v845, %v839
        %v972 = vpack.c.b16 %v846, %v840
        %v973 = vpack.c.b16 %v847, %v841
        %v974 = vpack.c.b16 %v848, %v842
        %v975 = vpack.c.b16 %v849, %v843
        %v976 = vpack.c.b16 %v856, %v850
        %v977 = vpack.c.b16 %v857, %v851
        %v978 = vpack.c.b16 %v858, %v852
        %v979 = vpack.c.b16 %v859, %v853
        %v980 = vpack.c.b16 %v860, %v854
        %v981 = vpack.c.b16 %v861, %v855
        %v982 = vpack.c.b16 %v868, %v862
        %v983 = vpack.c.b16 %v869, %v863
        %v984 = vpack.c.b16 %v870, %v864
        %v985 = vpack.c.b16 %v871, %v865
        %v986 = vpack.c.b16 %v872, %v866
        %v987 = vpack.c.b16 %v873, %v867
        %v988 = vpack.c.b16 %v880, %v874
        %v989 = vpack.c.b16 %v881, %v875
        %v990 = vpack.c.b16 %v882, %v876
        %v991 = vpack.c.b16 %v883, %v877
        %v992 = vpack.c.b16 %v884, %v878
        %v993 = vpack.c.b16 %v885, %v879
        %v994 = vpack.c.b16 %v892, %v886
        %v995 = vpack.c.b16 %v893, %v887
        %v996 = vpack.c.b16 %v894, %v888
        %v997 = vpack.c.b16 %v895, %v889
        %v998 = vpack.c.b16 %v896, %v890
        %v999 = vpack.c.b16 %v897, %v891
        %v1000 = vpack.c.b16 %v904, %v898
        %v1001 = vpack.c.b16 %v905, %v899
        %v1002 = vpack.c.b16 %v906, %v900
        %v1003 = vpack.c.b16 %v907, %v901
        %v1004 = vpack.c.b16 %v908, %v902
        %v1005 = vpack.c.b16 %v909, %v903
        %1102 = vmatpush.bf16.msra.mxu0 %v952
        %1103 = vmatpush.bf16.msra.mxu0 %v946
        %1104 = vmatpush.bf16.msra.mxu0 %v940
        %1105 = vmatpush.bf16.msra.mxu0 %v934
        %1106 = vmatpush.bf16.msra.mxu0 %v928
        %1107 = vmatpush.bf16.msra.mxu0 %v922
        %1108 = vmatpush.bf16.msra.mxu0 %v916
        %1109 = vmatpush.bf16.msra.mxu0 %v910
        %1110 = vmatmul.bf16.gmra.mxu0 %v618
        %v1111 = vpop.f32.mrf.mxu0
        %v1112 = vadd.f32 0.0, %v1111
        %v1113 = vpop.f32.mrf.mxu0
        %1114 = vdwg.mxu0
        %1115 = vmatpush.bf16.msra.mxu0 %v1000
        %1116 = vmatpush.bf16.msra.mxu0 %v994
        %1117 = vmatpush.bf16.msra.mxu0 %v988
        %1118 = vmatpush.bf16.msra.mxu0 %v982
        %1119 = vmatpush.bf16.msra.mxu0 %v976
        %1120 = vmatpush.bf16.msra.mxu0 %v970
        %1121 = vmatpush.bf16.msra.mxu0 %v964
        %1122 = vmatpush.bf16.msra.mxu0 %v958
        %1123 = vmatmul.bf16.gmra.mxu0 %v619
        %v1124 = vpop.f32.mrf.mxu0
        %v1125 = vadd.f32 %v1112, %v1124
        %v1126 = vpop.f32.mrf.mxu0
        %1127 = vdwg.mxu0
        %1128 = vmatpush.bf16.msra.mxu0 %v953
        %1129 = vmatpush.bf16.msra.mxu0 %v947
        %1130 = vmatpush.bf16.msra.mxu0 %v941
        %1131 = vmatpush.bf16.msra.mxu0 %v935
        %1132 = vmatpush.bf16.msra.mxu0 %v929
        %1133 = vmatpush.bf16.msra.mxu0 %v923
        %1134 = vmatpush.bf16.msra.mxu0 %v917
        %1135 = vmatpush.bf16.msra.mxu0 %v911
        %1136 = vmatmul.bf16.gmra.mxu0 %v618
        %v1137 = vpop.f32.mrf.mxu0
        %v1138 = vadd.f32 0.0, %v1137
        %v1139 = vpop.f32.mrf.mxu0
        %1140 = vdwg.mxu0
        %1141 = vmatpush.bf16.msra.mxu0 %v1001
        %1142 = vmatpush.bf16.msra.mxu0 %v995
        %1143 = vmatpush.bf16.msra.mxu0 %v989
        %1144 = vmatpush.bf16.msra.mxu0 %v983
        %1145 = vmatpush.bf16.msra.mxu0 %v977
        %1146 = vmatpush.bf16.msra.mxu0 %v971
        %1147 = vmatpush.bf16.msra.mxu0 %v965
        %1148 = vmatpush.bf16.msra.mxu0 %v959
        %1149 = vmatmul.bf16.gmra.mxu0 %v619
        %v1150 = vpop.f32.mrf.mxu0
        %v1151 = vadd.f32 %v1138, %v1150
        %v1152 = vpop.f32.mrf.mxu0
        %1153 = vdwg.mxu0
        %1154 = vmatpush.bf16.msra.mxu0 %v954
        %1155 = vmatpush.bf16.msra.mxu0 %v948
        %1156 = vmatpush.bf16.msra.mxu0 %v942
        %1157 = vmatpush.bf16.msra.mxu0 %v936
        %1158 = vmatpush.bf16.msra.mxu0 %v930
        %1159 = vmatpush.bf16.msra.mxu0 %v924
        %1160 = vmatpush.bf16.msra.mxu0 %v918
        %1161 = vmatpush.bf16.msra.mxu0 %v912
        %1162 = vmatmul.bf16.gmra.mxu0 %v618
        %v1163 = vpop.f32.mrf.mxu0
        %v1164 = vadd.f32 0.0, %v1163
        %v1165 = vpop.f32.mrf.mxu0
        %1166 = vdwg.mxu0
        %1167 = vmatpush.bf16.msra.mxu0 %v1002
        %1168 = vmatpush.bf16.msra.mxu0 %v996
        %1169 = vmatpush.bf16.msra.mxu0 %v990
        %1170 = vmatpush.bf16.msra.mxu0 %v984
        %1171 = vmatpush.bf16.msra.mxu0 %v978
        %1172 = vmatpush.bf16.msra.mxu0 %v972
        %1173 = vmatpush.bf16.msra.mxu0 %v966
        %1174 = vmatpush.bf16.msra.mxu0 %v960
        %1175 = vmatmul.bf16.gmra.mxu0 %v619
        %v1176 = vpop.f32.mrf.mxu0
        %v1177 = vadd.f32 %v1164, %v1176
        %v1178 = vpop.f32.mrf.mxu0
        %1179 = vdwg.mxu0
        %1180 = vmatpush.bf16.msra.mxu0 %v955
        %1181 = vmatpush.bf16.msra.mxu0 %v949
        %1182 = vmatpush.bf16.msra.mxu0 %v943
        %1183 = vmatpush.bf16.msra.mxu0 %v937
        %1184 = vmatpush.bf16.msra.mxu0 %v931
        %1185 = vmatpush.bf16.msra.mxu0 %v925
        %1186 = vmatpush.bf16.msra.mxu0 %v919
        %1187 = vmatpush.bf16.msra.mxu0 %v913
        %1188 = vmatmul.bf16.gmra.mxu0 %v618
        %v1189 = vpop.f32.mrf.mxu0
        %v1190 = vadd.f32 0.0, %v1189
        %v1191 = vpop.f32.mrf.mxu0
        %1192 = vdwg.mxu0
        %1193 = vmatpush.bf16.msra.mxu0 %v1003
        %1194 = vmatpush.bf16.msra.mxu0 %v997
        %1195 = vmatpush.bf16.msra.mxu0 %v991
        %1196 = vmatpush.bf16.msra.mxu0 %v985
        %1197 = vmatpush.bf16.msra.mxu0 %v979
        %1198 = vmatpush.bf16.msra.mxu0 %v973
        %1199 = vmatpush.bf16.msra.mxu0 %v967
        %1200 = vmatpush.bf16.msra.mxu0 %v961
        %1201 = vmatmul.bf16.gmra.mxu0 %v619
        %v1202 = vpop.f32.mrf.mxu0
        %v1203 = vadd.f32 %v1190, %v1202
        %v1204 = vpop.f32.mrf.mxu0
        %1205 = vdwg.mxu0
        %1206 = vmatpush.bf16.msra.mxu0 %v956
        %1207 = vmatpush.bf16.msra.mxu0 %v950
        %1208 = vmatpush.bf16.msra.mxu0 %v944
        %1209 = vmatpush.bf16.msra.mxu0 %v938
        %1210 = vmatpush.bf16.msra.mxu0 %v932
        %1211 = vmatpush.bf16.msra.mxu0 %v926
        %1212 = vmatpush.bf16.msra.mxu0 %v920
        %1213 = vmatpush.bf16.msra.mxu0 %v914
        %1214 = vmatmul.bf16.gmra.mxu0 %v618
        %v1215 = vpop.f32.mrf.mxu0
        %v1216 = vadd.f32 0.0, %v1215
        %v1217 = vpop.f32.mrf.mxu0
        %1218 = vdwg.mxu0
        %1219 = vmatpush.bf16.msra.mxu0 %v1004
        %1220 = vmatpush.bf16.msra.mxu0 %v998
        %1221 = vmatpush.bf16.msra.mxu0 %v992
        %1222 = vmatpush.bf16.msra.mxu0 %v986
        %1223 = vmatpush.bf16.msra.mxu0 %v980
        %1224 = vmatpush.bf16.msra.mxu0 %v974
        %1225 = vmatpush.bf16.msra.mxu0 %v968
        %1226 = vmatpush.bf16.msra.mxu0 %v962
        %1227 = vmatmul.bf16.gmra.mxu0 %v619
        %v1228 = vpop.f32.mrf.mxu0
        %v1229 = vadd.f32 %v1216, %v1228
        %v1230 = vpop.f32.mrf.mxu0
        %1231 = vdwg.mxu0
        %1232 = vmatpush.bf16.msra.mxu0 %v957
        %1233 = vmatpush.bf16.msra.mxu0 %v951
        %1234 = vmatpush.bf16.msra.mxu0 %v945
        %1235 = vmatpush.bf16.msra.mxu0 %v939
        %1236 = vmatpush.bf16.msra.mxu0 %v933
        %1237 = vmatpush.bf16.msra.mxu0 %v927
        %1238 = vmatpush.bf16.msra.mxu0 %v921
        %1239 = vmatpush.bf16.msra.mxu0 %v915
        %1240 = vmatmul.bf16.gmra.mxu0 %v618
        %v1241 = vpop.f32.mrf.mxu0
        %v1242 = vadd.f32 0.0, %v1241
        %v1243 = vpop.f32.mrf.mxu0
        %1244 = vdwg.mxu0
        %1245 = vmatpush.bf16.msra.mxu0 %v1005
        %1246 = vmatpush.bf16.msra.mxu0 %v999
        %1247 = vmatpush.bf16.msra.mxu0 %v993
        %1248 = vmatpush.bf16.msra.mxu0 %v987
        %1249 = vmatpush.bf16.msra.mxu0 %v981
        %1250 = vmatpush.bf16.msra.mxu0 %v975
        %1251 = vmatpush.bf16.msra.mxu0 %v969
        %1252 = vmatpush.bf16.msra.mxu0 %v963
        %1253 = vmatmul.bf16.gmra.mxu0 %v619
        %v1254 = vpop.f32.mrf.mxu0
        %v1255 = vadd.f32 %v1242, %v1254
        %v1256 = vpop.f32.mrf.mxu0
        %1257 = vdwg.mxu0
        %v1258 = vld [vmem:[#allocation6] sm:$0xff]
        %v1259 = vld [vmem:[#allocation8] sm:$0xff]
        %v1260 = vmul.f32 %v1125, %v1258
        %1261 = vrot.lane.b32.xlu0 %v1125, 64
        %v1262 = vpop.permute.xlu0 %1261
        %v1263 = vmul.f32 %v1262, %v1259
        %v1264 = vadd.f32 %v1260, %v1263
        %v1265 = vmul.f32 %v1264, 0.088388346
        %v1266 = vpack.c.bf16 %v1265, %v1265
        %1267 = vst [vmem:[%s444] sm:$0xf] %v1266
        %v1268 = vmul.f32 %v1151, %v1258
        %1269 = vrot.lane.b32.xlu0 %v1151, 64
        %v1270 = vpop.permute.xlu0 %1269
        %v1271 = vmul.f32 %v1270, %v1259
        %v1272 = vadd.f32 %v1268, %v1271
        %v1273 = vpack.c.bf16 %v1272, %v1272
        %1274 = vst [vmem:[%s451] sm:$0xf] %v1273
        %v1275 = vpack.c.bf16 %v1177, %v1177
        %1276 = vst [vmem:[%s458] sm:$0xf] %v1275
        %v1277 = vmul.f32 %v1203, %v1258
        %1278 = vrot.lane.b32.xlu0 %v1203, 64
        %v1279 = vpop.permute.xlu0 %1278
        %v1280 = vmul.f32 %v1279, %v1259
        %v1281 = vadd.f32 %v1277, %v1280
        %v1282 = vmul.f32 %v1281, 0.088388346
        %v1283 = vpack.c.bf16 %v1282, %v1282
        %s1284 = scalar_lea.vmem %s444, 4 [#allocation12]
        %1285 = vst [vmem:[%s1284] sm:$0xf] %v1283
        %v1286 = vmul.f32 %v1229, %v1258
        %1287 = vrot.lane.b32.xlu0 %v1229, 64
        %v1288 = vpop.permute.xlu0 %1287
        %v1289 = vmul.f32 %v1288, %v1259
        %v1290 = vadd.f32 %v1286, %v1289
        %v1291 = vpack.c.bf16 %v1290, %v1290
        %s1292 = scalar_lea.vmem %s451, 4 [#allocation13]
        %1293 = vst [vmem:[%s1292] sm:$0xf] %v1291
        %v1294 = vpack.c.bf16 %v1255, %v1255
        %s1295 = scalar_lea.vmem %s458, 4 [#allocation15]
        %1296 = vst [vmem:[%s1295] sm:$0xf] %v1294
        %s1297 = sand.u32 %s210, 1
        %s1298 = scalar_lea.sflag [#allocation5], %s1297
        %s1299 = sand.u32 %s210, 1
        %s1300 = smul.addr %s1299, 8
        %s1301 = scalar_lea.vmem [#allocation12], %s1300
        %s1302 = sand.u32 %s31, 1
        %s1303 = scalar_lea.sflag [#allocation14], %s1302
        %s1304 = sand.u32 %s240, 1
        %s1305 = smul.addr %s1304, 8
        %s1306 = scalar_lea.vmem [#allocation13], %s1305
        %s1307 = sand.u32 %s31, 1
        %s1308 = scalar_lea.sflag [#allocation14], %s1307
        %s1309 = sand.u32 %s270, 1
        %s1310 = smul.addr %s1309, 8
        %s1311 = scalar_lea.vmem [#allocation15], %s1310
        // Predicated region
        $region69: #{tpu_custom_call.1} parent=43 // pred_check
          %p1312 = pneg %p220
        $region70: #{tpu_custom_call.1} parent=43 // pred_check_branch
          %1314 = sbr.rel (%p1312) target = $region72
        $region71: #{tpu_custom_call.1} parent=43 // pred_region
          %s1315 = smul.u32 2, %s38
          %1317 = vsyncadd %s1298, 0
          %s1318 = sadd.s32 %s37, %s1315
          %s1319 = smul.addr %s36, 2
          %s1320 = sadd.s32 %s1318, %s1319
          %s1321 = smul.addr %s1320, 4
          %s1322 = scalar_lea.hbm %s6, %s1321
          %s1323 = sshll.u32 %s1301, 4
          %s1324 = int_to_ptr.vmem [resolvable:$true] %s1323
          %s1325 = sshll.u32 %s1322, 4
          %s1326 = int_to_ptr.hbm [resolvable:$true] %s1325
          %1331 = dma.vmem_to_hbm [thread:$0]  %s1324, 128, %s1326, %s1298, 64, 64, 4
        $region72: #{tpu_custom_call.1} parent=43 // pred_fallthru
          _
        // Predicated region
        $region73: #{tpu_custom_call.1} parent=43 // pred_check
          %p1332 = pneg %p250
        $region74: #{tpu_custom_call.1} parent=43 // pred_check_branch
          %1334 = sbr.rel (%p1332) target = $region76
        $region75: #{tpu_custom_call.1} parent=43 // pred_region
          %s1335 = smul.u32 2, %s38
          %1337 = vsyncadd %s1303, 0
          %s1338 = sadd.s32 %s37, %s1335
          %s1339 = smul.addr %s36, 2
          %s1340 = sadd.s32 %s1338, %s1339
          %s1341 = smul.addr %s1340, 4
          %s1342 = scalar_lea.hbm %s7, %s1341
          %s1343 = sshll.u32 %s1306, 4
          %s1344 = int_to_ptr.vmem [resolvable:$true] %s1343
          %s1345 = sshll.u32 %s1342, 4
          %s1346 = int_to_ptr.hbm [resolvable:$true] %s1345
          %1351 = dma.vmem_to_hbm [thread:$0]  %s1344, 128, %s1346, %s1303, 64, 64, 4
        $region76: #{tpu_custom_call.1} parent=43 // pred_fallthru
          _
        // Predicated region
        $region77: #{tpu_custom_call.1} parent=43 // pred_check
          %p1352 = pneg %p280
        $region78: #{tpu_custom_call.1} parent=43 // pred_check_branch
          %1354 = sbr.rel (%p1352) target = $region80
        $region79: #{tpu_custom_call.1} parent=43 // pred_region
          %s1355 = smul.u32 2, %s38
          %1357 = vsyncadd %s1308, 0
          %s1358 = sadd.s32 %s37, %s1355
          %s1359 = smul.addr %s36, 2
          %s1360 = sadd.s32 %s1358, %s1359
          %s1361 = smul.addr %s1360, 4
          %s1362 = scalar_lea.hbm %s8, %s1361
          %s1363 = sshll.u32 %s1311, 4
          %s1364 = int_to_ptr.vmem [resolvable:$true] %s1363
          %s1365 = sshll.u32 %s1362, 4
          %s1366 = int_to_ptr.hbm [resolvable:$true] %s1365
          %1371 = dma.vmem_to_hbm [thread:$0]  %s1364, 128, %s1366, %s1308, 64, 64, 4
        $region80: #{tpu_custom_call.1} parent=43 // pred_fallthru
          _
      $region44: #{tpu_custom_call.1} parent=5 // pred_fallthru
        _
      %p1372 = scmp.le.s32.totalorder 2, %s26
      // Predicated region
      $region81: #{tpu_custom_call.1} parent=5 // pred_check
        %p1373 = pneg %p1372
      $region82: #{tpu_custom_call.1} parent=5 // pred_check_branch
        %1375 = sbr.rel (%p1373) target = $region84
      $region83: #{tpu_custom_call.1} parent=5 // pred_region
        %s1376 = ssub.s32 %s26, 2
        // Predicated region
        $region85: #{tpu_custom_call.1} parent=83 // pred_check
          %p1377 = pneg %p226
        $region86: #{tpu_custom_call.1} parent=83 // pred_check_branch
          %1379 = sbr.rel (%p1377) target = $region88
        $region87: #{tpu_custom_call.1} parent=83 // pred_region
          %s1380 = sand.u32 %s211, 1
          %s1381 = scalar_lea.sflag [#allocation5], %s1380
          %s1382 = sand.u32 %s211, 1
          %s1383 = smul.addr %s1382, 8
          %s1384 = scalar_lea.vmem [#allocation12], %s1383
          %1386 = dma.done %s1381, 128
        $region88: #{tpu_custom_call.1} parent=83 // pred_fallthru
          _
        // Predicated region
        $region89: #{tpu_custom_call.1} parent=83 // pred_check
          %p1387 = pneg %p256
        $region90: #{tpu_custom_call.1} parent=83 // pred_check_branch
          %1389 = sbr.rel (%p1387) target = $region92
        $region91: #{tpu_custom_call.1} parent=83 // pred_region
          %s1390 = sand.u32 %s32, 1
          %s1391 = scalar_lea.sflag [#allocation14], %s1390
          %s1392 = sand.u32 %s241, 1
          %s1393 = smul.addr %s1392, 8
          %s1394 = scalar_lea.vmem [#allocation13], %s1393
          %1396 = dma.done %s1391, 128
        $region92: #{tpu_custom_call.1} parent=83 // pred_fallthru
          _
        // Predicated region
        $region93: #{tpu_custom_call.1} parent=83 // pred_check
          %p1397 = pneg %p286
        $region94: #{tpu_custom_call.1} parent=83 // pred_check_branch
          %1399 = sbr.rel (%p1397) target = $region96
        $region95: #{tpu_custom_call.1} parent=83 // pred_region
          %s1400 = sand.u32 %s32, 1
          %s1401 = scalar_lea.sflag [#allocation14], %s1400
          %s1402 = sand.u32 %s271, 1
          %s1403 = smul.addr %s1402, 8
          %s1404 = scalar_lea.vmem [#allocation15], %s1403
          %1406 = dma.done %s1401, 128
        $region96: #{tpu_custom_call.1} parent=83 // pred_fallthru
          _
      $region84: #{tpu_custom_call.1} parent=5 // pred_fallthru
        _
    $region6: #{tpu_custom_call.1} parent=1 // loop_footer
      %s30 = sadd.s32 1, %s26
    $region7: #{tpu_custom_call.1} parent=1 // loop_footer_branch
      %25 = sbr.rel target = $region3
    $region8: #{tpu_custom_call.1} parent=1 // loop_exit
      _
    %1407 = vsyncpa [#allocation4], 1
    %s1408 = scalar_lea.sflag [#allocation4], 1
    %1409 = vsyncpa %s1408, 1
    %1410 = vsyncpa [#allocation7], 1
    %1411 = vsyncpa [#allocation10], 1
    %1412 = vsyncpa [#allocation5], 1
    %s1413 = scalar_lea.sflag [#allocation5], 1
    %1414 = vsyncpa %s1413, 1
    %1415 = vsyncpa [#allocation14], 1
    %s1416 = scalar_lea.sflag [#allocation14], 1
    %1417 = vsyncpa %s1416, 1

</llo_original>
